<compile_context>
chip_gen: v7x
topology: tpu7x:2x2x1
jax: 0.10.0
libtpu: 0.0.40
codegen_flags: <defaults>
</compile_context>

<pallas_src>
import functools

import jax
import jax.numpy as jnp
from jax.experimental import pallas as pl
from jax.experimental.pallas import tpu as pltpu


def _gelu(h):
    # tanh-approximation GELU (EUP-friendly); used identically in kernel & reference.
    return 0.5 * h * (1.0 + jnp.tanh(0.7978845608028654 * (h + 0.044715 * h * h * h)))


def _make_kernel(guidance_scale: float, compute_dtype):
    gs = float(guidance_scale)
    cdt = jnp.dtype(compute_dtype)

    def dot(a, b):
        return jnp.dot(a, b, preferred_element_type=jnp.float32)

    def kernel(x_ref, mu_ref, cond_ref, cmask_ref, mask_ref, bias_ref, avgh_ref,
               w1xc_ref, w1m_ref, w2t_ref, b2_ref, out_ref):
        # Block views (batch dim squeezed):
        #   x/mu/cond: (F, TT)   cmask/mask: (1, TT)   bias/avgh: (H, 1)
        #   w1xc: (H, 2F)  w1m: (H, F)  w2t: (F, H)  b2: (F, 1)  out: (F, TT)
        x = x_ref[...]
        cond = cond_ref[...] * cmask_ref[...]            # (F, TT) * (1, TT)
        xc = jnp.concatenate([x, cond], axis=0)          # (2F, TT) fused contraction

        # Shared first-layer base (identical for conditional and averaged-mu pass).
        base = dot(w1xc_ref[...], xc) + bias_ref[...]    # (H, TT) f32

        # Conditional-pass hidden.
        h_c = _gelu(base + dot(w1m_ref[...], mu_ref[...]))   # (H, TT) f32

        if gs > 0.0:  # static Python branch, mirrors `if self.guidance_scale > 0.0`
            # Averaged-mu pass: its first-layer contribution was precomputed in
            # the wrapper (time-mean over the FULL sequence) -> just a bias add.
            h_a = _gelu(base + avgh_ref[...])
            # out + gs*(out - out_avg) == W2 @ ((1+gs)*h_c - gs*h_a) + b2,
            # so fold the guidance combine into hidden space and run the
            # second-layer matmul only once.
            h = (1.0 + gs) * h_c - gs * h_a
        else:
            h = h_c

        out = dot(w2t_ref[...], h.astype(cdt)) + b2_ref[...]  # (F, TT) f32

        # mask is multiplicative, so applying it once after the guidance combine
        # is identical to masking both passes.
        out_ref[...] = (out * mask_ref[...]).astype(out_ref.dtype)

    return kernel


def _time_spk_bias(t, spk, params):
    """Sinusoidal time embedding -> bias, speaker projection -> bias (plain JAX glue)."""
    H = params["w2"].shape[0]
    half = H // 2
    freqs = jnp.exp(-jnp.log(10000.0) * jnp.arange(half, dtype=jnp.float32) / half)
    temb = jnp.concatenate([jnp.sin(t * freqs), jnp.cos(t * freqs)])       # (H,)
    tbias = (temb @ params["wt"] + params["bt"])[None, :]                  # (1, H)
    sbias = spk @ params["ws"]                                             # (B, H)
    return tbias.astype(jnp.float32), sbias.astype(jnp.float32)


def _pick_time_tile(T):
    # Production note: pick the largest lane-aligned tile the VMEM budget allows
    # (v6e ~2x the v7x tile; raise vmem_limit_bytes if needed).
    for tt in (1024, 512, 256, 128):
        if T % tt == 0:
            return tt
    return T  # fall back to "full time axis" (still a legal full-dim block)


@functools.partial(jax.jit,
                   static_argnames=("guidance_scale", "compute_dtype", "time_tile"))
def wrapper_forward(t, x, mask, mu, spk, cond, cond_mask, params, guidance_scale,
                    compute_dtype=jnp.bfloat16, time_tile=None):
    """Pallas-backed equivalent of Wrapper.forward(t, x, args). NCT in, NCT out."""
    B, F, T = x.shape
    H = params["w2"].shape[0]
    cdt = jnp.dtype(compute_dtype)

    TT = _pick_time_tile(T) if time_tile is None else int(time_tile)
    assert T % TT == 0, (T, TT)

    # --- small host-side (XLA) prep: biases, time-mean of mu, weight re-layout ---
    tbias, sbias = _time_spk_bias(t, spk, params)                       # (1,H), (B,H)
    bias_total = (params["b1"] + tbias + sbias).astype(jnp.float32)     # (B, H)
    bias_total = bias_total[:, :, None]                                 # (B, H, 1)

    # Time-mean of mu over the FULL sequence (must not be per-tile), projected
    # through W1m once -> tiny (B, H) hidden-space bias for the guidance pass.
    mu_mean = jnp.mean(mu.astype(jnp.float32), axis=2)                  # (B, F)
    avg_hid = (mu_mean @ params["w1m"]).astype(jnp.float32)[:, :, None]  # (B, H, 1)

    # NCT-oriented weights: h = W1^T @ x, out = W2^T @ h. Stack x/cond weights
    # so the shared first projection is a single K=2F contraction.
    w1xc = jnp.concatenate([params["w1x"].T, params["w1c"].T], axis=1).astype(cdt)  # (H, 2F)
    w1m_t = params["w1m"].T.astype(cdt)                                 # (H, F)
    w2_t = params["w2"].T.astype(cdt)                                   # (F, H)
    b2_c = params["b2"].T.astype(jnp.float32)                           # (F, 1)

    x_c = x.astype(cdt)
    mu_c = mu.astype(cdt)
    cond_c = cond.astype(cdt)
    cmask_c = cond_mask.astype(cdt)
    mask_f = mask.astype(jnp.float32)

    grid = (B, T // TT)

    def bt_spec(c):      # (B, c, T) arrays tiled over (batch, time-tile)
        return pl.BlockSpec((pl.Squeezed(), c, TT), lambda b, s: (b, 0, s))

    def b_spec(c, w):    # per-batch constant small arrays (B, c, w)
        return pl.BlockSpec((pl.Squeezed(), c, w), lambda b, s: (b, 0, 0))

    def shared(shape):   # weights: constant index_map -> resident in VMEM
        return pl.BlockSpec(shape, lambda b, s: (0,) * len(shape))

    out = pl.pallas_call(
        _make_kernel(float(guidance_scale), cdt),
        out_shape=jax.ShapeDtypeStruct((B, F, T), jnp.float32),
        grid=grid,
        in_specs=[
            bt_spec(F),          # x
            bt_spec(F),          # mu
            bt_spec(F),          # cond
            bt_spec(1),          # cond_mask
            bt_spec(1),          # mask
            b_spec(H, 1),        # folded bias (b1 + time + speaker)
            b_spec(H, 1),        # averaged-mu hidden bias (guidance pass)
            shared((H, 2 * F)),  # stacked [W1x^T | W1c^T]
            shared((H, F)),      # W1m^T
            shared((F, H)),      # W2^T
            shared((F, 1)),      # b2
        ],
        out_specs=bt_spec(F),
        compiler_params=pltpu.CompilerParams(
            dimension_semantics=("parallel", "parallel")),
    )(x_c, mu_c, cond_c, cmask_c, mask_f, bias_total, avg_hid,
      w1xc, w1m_t, w2_t, b2_c)

    return out


def reference_forward(t, x, mask, mu, spk, cond, cond_mask, params, guidance_scale):
    """Pure-JAX f32 reference with the original Wrapper semantics (NCT layout)."""
    tbias, sbias = _time_spk_bias(t, spk, params)

    def net(mu_in):
        xt = jnp.transpose(x, (0, 2, 1))
        mut = jnp.transpose(mu_in, (0, 2, 1))
        condt = jnp.transpose(cond, (0, 2, 1)) * jnp.transpose(cond_mask, (0, 2, 1))
        h = (xt @ params["w1x"] + mut @ params["w1m"] + condt @ params["w1c"]
             + params["b1"] + tbias[None, :, :] + sbias[:, None, :])
        h = _gelu(h)
        o = h @ params["w2"] + params["b2"]
        o = o * jnp.transpose(mask, (0, 2, 1))
        return jnp.transpose(o, (0, 2, 1))

    dphi = net(mu)
    if guidance_scale > 0.0:
        mu_avg = jnp.broadcast_to(jnp.mean(mu, axis=2, keepdims=True), mu.shape)
        dphi_avg = net(mu_avg)
        dphi = dphi + guidance_scale * (dphi - dphi_avg)
    return dphi


if __name__ == "__main__":
    B, F, T = 2, 32, 256     # batch, n_feats (channels), time frames
    H = 64                    # hidden width of the synthetic vector-field net
    SPK = 16                  # speaker embedding dim
    GUIDANCE_SCALE = 0.7

    key = jax.random.PRNGKey(0)
    ks = jax.random.split(key, 12)

    params = {
        "w1x": jax.random.normal(ks[0], (F, H), jnp.float32) / jnp.sqrt(F),
        "w1m": jax.random.normal(ks[1], (F, H), jnp.float32) / jnp.sqrt(F),
        "w1c": jax.random.normal(ks[2], (F, H), jnp.float32) / jnp.sqrt(F),
        "b1":  jax.random.normal(ks[3], (1, H), jnp.float32) * 0.01,
        "w2":  jax.random.normal(ks[4], (H, F), jnp.float32) / jnp.sqrt(H),
        "b2":  jax.random.normal(ks[5], (1, F), jnp.float32) * 0.01,
        "wt":  jax.random.normal(ks[6], (H, H), jnp.float32) / jnp.sqrt(H),
        "bt":  jax.random.normal(ks[7], (H,), jnp.float32) * 0.01,
        "ws":  jax.random.normal(ks[8], (SPK, H), jnp.float32) / jnp.sqrt(SPK),
    }

    x = jax.random.normal(ks[9], (B, F, T), jnp.float32)
    mu = jax.random.normal(ks[10], (B, F, T), jnp.float32)
    cond = jax.random.normal(ks[11], (B, F, T), jnp.float32)
    spk = jax.random.normal(jax.random.fold_in(key, 99), (B, SPK), jnp.float32)

    # Binary masks (B, 1, T), as in the PyTorch module.
    mask = (jax.random.uniform(jax.random.fold_in(key, 100), (B, 1, T)) > 0.2).astype(jnp.float32)
    cond_mask = (jax.random.uniform(jax.random.fold_in(key, 101), (B, 1, T)) > 0.5).astype(jnp.float32)

    t = jnp.float32(0.37)  # ODE time scalar (Wrapper turns it into torch.tensor([t]))

    ref = reference_forward(t, x, mask, mu, spk, cond, cond_mask, params, GUIDANCE_SCALE)

    # f32 compute path: tight check (time_tile=128 exercises the multi-tile grid,
    # the precomputed full-sequence mu mean, and the hidden-space guidance fuse).
    out_f32 = wrapper_forward(t, x, mask, mu, spk, cond, cond_mask, params,
                              GUIDANCE_SCALE, compute_dtype=jnp.float32, time_tile=128)
    out_f32 = jax.block_until_ready(out_f32)
    assert out_f32.shape == (B, F, T), out_f32.shape
    assert jnp.allclose(out_f32, ref, atol=1e-3, rtol=1e-3), \
        float(jnp.max(jnp.abs(out_f32 - ref)))

    # guidance_scale = 0 path (static branch without the averaged-mu pass).
    ref0 = reference_forward(t, x, mask, mu, spk, cond, cond_mask, params, 0.0)
    out0 = wrapper_forward(t, x, mask, mu, spk, cond, cond_mask, params,
                           0.0, compute_dtype=jnp.float32, time_tile=128)
    out0 = jax.block_until_ready(out0)
    assert jnp.allclose(out0, ref0, atol=1e-3, rtol=1e-3), \
        float(jnp.max(jnp.abs(out0 - ref0)))

    # bf16 compute path (MXU-friendly inputs, f32 accumulation): loose check.
    out_bf16 = wrapper_forward(t, x, mask, mu, spk, cond, cond_mask, params,
                               GUIDANCE_SCALE, compute_dtype=jnp.bfloat16, time_tile=128)
    out_bf16 = jax.block_until_ready(out_bf16)
    assert out_bf16.shape == (B, F, T), out_bf16.shape
    assert jnp.allclose(out_bf16, ref, atol=3e-1, rtol=5e-2), \
        float(jnp.max(jnp.abs(out_bf16 - ref)))

    print("KERNEL_OK")
</pallas_src>

<mosaic_0001>
module attributes {stable_mosaic.version = 11 : i64} {
  func.func @kernel(%arg0: i32, %arg1: i32, %arg2: memref<1x32x128xf32, #tpu.memory_space<vmem>>, %arg3: memref<1x32x128xf32, #tpu.memory_space<vmem>>, %arg4: memref<1x32x128xf32, #tpu.memory_space<vmem>>, %arg5: memref<1x1x128xf32, #tpu.memory_space<vmem>>, %arg6: memref<1x1x128xf32, #tpu.memory_space<vmem>>, %arg7: memref<1x64x1xf32, #tpu.memory_space<vmem>>, %arg8: memref<1x64x1xf32, #tpu.memory_space<vmem>>, %arg9: memref<64x64xf32, #tpu.memory_space<vmem>>, %arg10: memref<64x32xf32, #tpu.memory_space<vmem>>, %arg11: memref<32x64xf32, #tpu.memory_space<vmem>>, %arg12: memref<32x1xf32, #tpu.memory_space<vmem>>, %arg13: memref<1x32x128xf32, #tpu.memory_space<vmem>>) attributes {dimension_semantics = [#tpu.dimension_semantics<parallel>, #tpu.dimension_semantics<parallel>], iteration_bounds = array<i64: 2, 2>, scalar_prefetch = 0 : i64, scratch_operands = 0 : i64, tpu.core_type = #tpu.core_type<tc>, window_params = [{transform_indices = @transform_0, window_bounds = array<i64: 1, 32, 128>}, {transform_indices = @transform_1, window_bounds = array<i64: 1, 32, 128>}, {transform_indices = @transform_2, window_bounds = array<i64: 1, 32, 128>}, {transform_indices = @transform_3, window_bounds = array<i64: 1, 1, 128>}, {transform_indices = @transform_4, window_bounds = array<i64: 1, 1, 128>}, {transform_indices = @transform_5, window_bounds = array<i64: 1, 64, 1>}, {transform_indices = @transform_6, window_bounds = array<i64: 1, 64, 1>}, {pipeline_mode = #tpu.pipeline_mode<synchronous>, transform_indices = @transform_7, window_bounds = array<i64: 64, 64>}, {pipeline_mode = #tpu.pipeline_mode<synchronous>, transform_indices = @transform_8, window_bounds = array<i64: 64, 32>}, {pipeline_mode = #tpu.pipeline_mode<synchronous>, transform_indices = @transform_9, window_bounds = array<i64: 32, 64>}, {pipeline_mode = #tpu.pipeline_mode<synchronous>, transform_indices = @transform_10, window_bounds = array<i64: 32, 1>}, {transform_indices = @transform_11, window_bounds = array<i64: 1, 32, 128>}]} {
    %c0 = arith.constant 0 : index
    %c0_0 = arith.constant 0 : index
    %c0_1 = arith.constant 0 : index
    %0 = vector.load %arg2[%c0, %c0_0, %c0_1] : memref<1x32x128xf32, #tpu.memory_space<vmem>>, vector<1x32x128xf32>
    %1 = vector.shape_cast %0 : vector<1x32x128xf32> to vector<32x128xf32>
    %c0_2 = arith.constant 0 : index
    %c0_3 = arith.constant 0 : index
    %c0_4 = arith.constant 0 : index
    %2 = vector.load %arg4[%c0_2, %c0_3, %c0_4] : memref<1x32x128xf32, #tpu.memory_space<vmem>>, vector<1x32x128xf32>
    %3 = vector.shape_cast %2 : vector<1x32x128xf32> to vector<32x128xf32>
    %c0_5 = arith.constant 0 : index
    %c0_6 = arith.constant 0 : index
    %c0_7 = arith.constant 0 : index
    %4 = vector.load %arg5[%c0_5, %c0_6, %c0_7] : memref<1x1x128xf32, #tpu.memory_space<vmem>>, vector<1x1x128xf32>
    %5 = vector.shape_cast %4 : vector<1x1x128xf32> to vector<1x128xf32>
    %6 = vector.broadcast %5 : vector<1x128xf32> to vector<32x128xf32>
    %7 = arith.mulf %3, %6 : vector<32x128xf32>
    %8 = tpu.concatenate %1, %7 in 0 : vector<32x128xf32>, vector<32x128xf32> -> vector<64x128xf32>
    %c0_8 = arith.constant 0 : index
    %c0_9 = arith.constant 0 : index
    %9 = vector.load %arg9[%c0_8, %c0_9] : memref<64x64xf32, #tpu.memory_space<vmem>>, vector<64x64xf32>
    %cst = arith.constant dense<0.000000e+00> : vector<64x128xf32>
    %10 = tpu.matmul %9, %8, %cst {dimension_numbers = #tpu.dot_dimension_numbers<[1], [0], [0], [1], [0, 0, 1, 1], [], []>} : vector<64x64xf32>, vector<64x128xf32>, vector<64x128xf32> -> vector<64x128xf32>
    %c0_10 = arith.constant 0 : index
    %c0_11 = arith.constant 0 : index
    %c0_12 = arith.constant 0 : index
    %11 = vector.load %arg7[%c0_10, %c0_11, %c0_12] : memref<1x64x1xf32, #tpu.memory_space<vmem>>, vector<1x64x1xf32>
    %12 = vector.shape_cast %11 : vector<1x64x1xf32> to vector<64x1xf32>
    %13 = vector.broadcast %12 : vector<64x1xf32> to vector<64x128xf32>
    %14 = arith.addf %10, %13 : vector<64x128xf32>
    %c0_13 = arith.constant 0 : index
    %c0_14 = arith.constant 0 : index
    %15 = vector.load %arg10[%c0_13, %c0_14] : memref<64x32xf32, #tpu.memory_space<vmem>>, vector<64x32xf32>
    %c0_15 = arith.constant 0 : index
    %c0_16 = arith.constant 0 : index
    %c0_17 = arith.constant 0 : index
    %16 = vector.load %arg3[%c0_15, %c0_16, %c0_17] : memref<1x32x128xf32, #tpu.memory_space<vmem>>, vector<1x32x128xf32>
    %17 = vector.shape_cast %16 : vector<1x32x128xf32> to vector<32x128xf32>
    %cst_18 = arith.constant dense<0.000000e+00> : vector<64x128xf32>
    %18 = tpu.matmul %15, %17, %cst_18 {dimension_numbers = #tpu.dot_dimension_numbers<[1], [0], [0], [1], [0, 0, 1, 1], [], []>} : vector<64x32xf32>, vector<32x128xf32>, vector<64x128xf32> -> vector<64x128xf32>
    %19 = arith.addf %14, %18 : vector<64x128xf32>
    %cst_19 = arith.constant 5.000000e-01 : f32
    %20 = vector.broadcast %cst_19 : f32 to vector<64x128xf32>
    %21 = arith.mulf %20, %19 : vector<64x128xf32>
    %cst_20 = arith.constant 4.471500e-02 : f32
    %22 = vector.broadcast %cst_20 : f32 to vector<64x128xf32>
    %23 = arith.mulf %22, %19 : vector<64x128xf32>
    %24 = arith.mulf %23, %19 : vector<64x128xf32>
    %25 = arith.mulf %24, %19 : vector<64x128xf32>
    %26 = arith.addf %19, %25 : vector<64x128xf32>
    %cst_21 = arith.constant 0.797884583 : f32
    %27 = vector.broadcast %cst_21 : f32 to vector<64x128xf32>
    %28 = arith.mulf %27, %26 : vector<64x128xf32>
    %29 = math.tanh %28 : vector<64x128xf32>
    %cst_22 = arith.constant 1.000000e+00 : f32
    %30 = vector.broadcast %cst_22 : f32 to vector<64x128xf32>
    %31 = arith.addf %30, %29 : vector<64x128xf32>
    %32 = arith.mulf %21, %31 : vector<64x128xf32>
    %c0_23 = arith.constant 0 : index
    %c0_24 = arith.constant 0 : index
    %c0_25 = arith.constant 0 : index
    %33 = vector.load %arg8[%c0_23, %c0_24, %c0_25] : memref<1x64x1xf32, #tpu.memory_space<vmem>>, vector<1x64x1xf32>
    %34 = vector.shape_cast %33 : vector<1x64x1xf32> to vector<64x1xf32>
    %35 = vector.broadcast %34 : vector<64x1xf32> to vector<64x128xf32>
    %36 = arith.addf %14, %35 : vector<64x128xf32>
    %cst_26 = arith.constant 5.000000e-01 : f32
    %37 = vector.broadcast %cst_26 : f32 to vector<64x128xf32>
    %38 = arith.mulf %37, %36 : vector<64x128xf32>
    %cst_27 = arith.constant 4.471500e-02 : f32
    %39 = vector.broadcast %cst_27 : f32 to vector<64x128xf32>
    %40 = arith.mulf %39, %36 : vector<64x128xf32>
    %41 = arith.mulf %40, %36 : vector<64x128xf32>
    %42 = arith.mulf %41, %36 : vector<64x128xf32>
    %43 = arith.addf %36, %42 : vector<64x128xf32>
    %cst_28 = arith.constant 0.797884583 : f32
    %44 = vector.broadcast %cst_28 : f32 to vector<64x128xf32>
    %45 = arith.mulf %44, %43 : vector<64x128xf32>
    %46 = math.tanh %45 : vector<64x128xf32>
    %cst_29 = arith.constant 1.000000e+00 : f32
    %47 = vector.broadcast %cst_29 : f32 to vector<64x128xf32>
    %48 = arith.addf %47, %46 : vector<64x128xf32>
    %49 = arith.mulf %38, %48 : vector<64x128xf32>
    %cst_30 = arith.constant 1.700000e+00 : f32
    %50 = vector.broadcast %cst_30 : f32 to vector<64x128xf32>
    %51 = arith.mulf %50, %32 : vector<64x128xf32>
    %cst_31 = arith.constant 0.699999988 : f32
    %52 = vector.broadcast %cst_31 : f32 to vector<64x128xf32>
    %53 = arith.mulf %52, %49 : vector<64x128xf32>
    %54 = arith.subf %51, %53 : vector<64x128xf32>
    %c0_32 = arith.constant 0 : index
    %c0_33 = arith.constant 0 : index
    %55 = vector.load %arg11[%c0_32, %c0_33] : memref<32x64xf32, #tpu.memory_space<vmem>>, vector<32x64xf32>
    %cst_34 = arith.constant dense<0.000000e+00> : vector<32x128xf32>
    %56 = tpu.matmul %55, %54, %cst_34 {dimension_numbers = #tpu.dot_dimension_numbers<[1], [0], [0], [1], [0, 0, 1, 1], [], []>} : vector<32x64xf32>, vector<64x128xf32>, vector<32x128xf32> -> vector<32x128xf32>
    %c0_35 = arith.constant 0 : index
    %c0_36 = arith.constant 0 : index
    %57 = vector.load %arg12[%c0_35, %c0_36] : memref<32x1xf32, #tpu.memory_space<vmem>>, vector<32x1xf32>
    %58 = vector.broadcast %57 : vector<32x1xf32> to vector<32x128xf32>
    %59 = arith.addf %56, %58 : vector<32x128xf32>
    %c0_37 = arith.constant 0 : index
    %c0_38 = arith.constant 0 : index
    %c0_39 = arith.constant 0 : index
    %60 = vector.load %arg6[%c0_37, %c0_38, %c0_39] : memref<1x1x128xf32, #tpu.memory_space<vmem>>, vector<1x1x128xf32>
    %61 = vector.shape_cast %60 : vector<1x1x128xf32> to vector<1x128xf32>
    %62 = vector.broadcast %61 : vector<1x128xf32> to vector<32x128xf32>
    %63 = arith.mulf %59, %62 : vector<32x128xf32>
    %c0_40 = arith.constant 0 : index
    %c0_41 = arith.constant 0 : index
    %c0_42 = arith.constant 0 : index
    %64 = vector.load %arg13[%c0_40, %c0_41, %c0_42] : memref<1x32x128xf32, #tpu.memory_space<vmem>>, vector<1x32x128xf32>
    %65 = vector.shape_cast %64 : vector<1x32x128xf32> to vector<32x128xf32>
    %66 = vector.shape_cast %63 : vector<32x128xf32> to vector<1x32x128xf32>
    tpu.vector_store %arg13[%c0_40, %c0_41, %c0_42], %66 {strides = array<i32>} : memref<1x32x128xf32, #tpu.memory_space<vmem>>, vector<1x32x128xf32>,
    return
  }
  func.func @transform_0(%arg0: i32, %arg1: i32) -> (i32, i32, i32) {
    %c0_i32 = arith.constant 0 : i32
    %c0_i32_0 = arith.constant 0 : i32
    return %arg0, %c0_i32, %arg1 : i32, i32, i32
  }
  func.func @transform_1(%arg0: i32, %arg1: i32) -> (i32, i32, i32) {
    %c0_i32 = arith.constant 0 : i32
    %c0_i32_0 = arith.constant 0 : i32
    return %arg0, %c0_i32, %arg1 : i32, i32, i32
  }
  func.func @transform_2(%arg0: i32, %arg1: i32) -> (i32, i32, i32) {
    %c0_i32 = arith.constant 0 : i32
    %c0_i32_0 = arith.constant 0 : i32
    return %arg0, %c0_i32, %arg1 : i32, i32, i32
  }
  func.func @transform_3(%arg0: i32, %arg1: i32) -> (i32, i32, i32) {
    %c0_i32 = arith.constant 0 : i32
    %c0_i32_0 = arith.constant 0 : i32
    return %arg0, %c0_i32, %arg1 : i32, i32, i32
  }
  func.func @transform_4(%arg0: i32, %arg1: i32) -> (i32, i32, i32) {
    %c0_i32 = arith.constant 0 : i32
    %c0_i32_0 = arith.constant 0 : i32
    return %arg0, %c0_i32, %arg1 : i32, i32, i32
  }
  func.func @transform_5(%arg0: i32, %arg1: i32) -> (i32, i32, i32) {
    %c0_i32 = arith.constant 0 : i32
    %c0_i32_0 = arith.constant 0 : i32
    %c0_i32_1 = arith.constant 0 : i32
    return %arg0, %c0_i32, %c0_i32_0 : i32, i32, i32
  }
  func.func @transform_6(%arg0: i32, %arg1: i32) -> (i32, i32, i32) {
    %c0_i32 = arith.constant 0 : i32
    %c0_i32_0 = arith.constant 0 : i32
    %c0_i32_1 = arith.constant 0 : i32
    return %arg0, %c0_i32, %c0_i32_0 : i32, i32, i32
  }
  func.func @transform_7(%arg0: i32, %arg1: i32) -> (i32, i32) {
    %c0_i32 = arith.constant 0 : i32
    %c0_i32_0 = arith.constant 0 : i32
    %c0_i32_1 = arith.constant 0 : i32
    return %c0_i32, %c0_i32_0 : i32, i32
  }
  func.func @transform_8(%arg0: i32, %arg1: i32) -> (i32, i32) {
    %c0_i32 = arith.constant 0 : i32
    %c0_i32_0 = arith.constant 0 : i32
    %c0_i32_1 = arith.constant 0 : i32
    return %c0_i32, %c0_i32_0 : i32, i32
  }
  func.func @transform_9(%arg0: i32, %arg1: i32) -> (i32, i32) {
    %c0_i32 = arith.constant 0 : i32
    %c0_i32_0 = arith.constant 0 : i32
    %c0_i32_1 = arith.constant 0 : i32
    return %c0_i32, %c0_i32_0 : i32, i32
  }
  func.func @transform_10(%arg0: i32, %arg1: i32) -> (i32, i32) {
    %c0_i32 = arith.constant 0 : i32
    %c0_i32_0 = arith.constant 0 : i32
    %c0_i32_1 = arith.constant 0 : i32
    return %c0_i32, %c0_i32_0 : i32, i32
  }
  func.func @transform_11(%arg0: i32, %arg1: i32) -> (i32, i32, i32) {
    %c0_i32 = arith.constant 0 : i32
    %c0_i32_0 = arith.constant 0 : i32
    return %arg0, %c0_i32, %arg1 : i32, i32, i32
  }
}

</mosaic_0001>

<llo_original>
// kernel: wrapper_forward.1
$region0: #{wrapper_forward.1}
  #allocation0 [shape = 'u32[]', space=smem, size = 0x4, offset = 0x4, fixed_abs, tag = 'smem constant byte address 0x4 - core index']
  #allocation1 [shape = 'u32[144,128]{1,0:T(1,128)}', space=vmem, size = 0x12000, scoped, tag = 'internal scratch']
  %s0 = inlined_call_operand.vmem [shape: f32[2,32,256], index: 0, kind: input, shape index: {}]
  %s1 = inlined_call_operand.vmem [shape: f32[2,32,256], index: 1, kind: input, shape index: {}]
  %s2 = inlined_call_operand.vmem [shape: f32[2,32,256], index: 2, kind: input, shape index: {}]
  %s3 = inlined_call_operand.vmem [shape: f32[2,1,256], index: 3, kind: input, shape index: {}]
  %s4 = inlined_call_operand.vmem [shape: f32[2,1,256], index: 4, kind: input, shape index: {}]
  %s5 = inlined_call_operand.vmem [shape: f32[2,64,1], index: 5, kind: input, shape index: {}]
  %s6 = inlined_call_operand.vmem [shape: f32[2,64,1], index: 6, kind: input, shape index: {}]
  %s7 = inlined_call_operand.vmem [shape: f32[64,64], index: 7, kind: input, shape index: {}]
  %s8 = inlined_call_operand.vmem [shape: f32[64,32], index: 8, kind: input, shape index: {}]
  %s9 = inlined_call_operand.vmem [shape: f32[32,64], index: 9, kind: input, shape index: {}]
  %s10 = inlined_call_operand.vmem [shape: f32[32,1], index: 10, kind: input, shape index: {}]
  %s11 = inlined_call_operand.hbm [shape: f32[2,32,256], index: 11, kind: output, shape index: {}]
  %s12 = sld [smem:[#allocation0]]
  $region191: #{wrapper_forward.1} parent=0
    _
  %s14 = ssub.s32 1, %s12
  %s15 = scalar_select 0, %s14, %s12
  $region1: #{wrapper_forward.1} parent=0
    #allocation2 [shape = 'u8[32768]{0}', space=vmem, size = 0x8000, scoped, tag = 'input window, operand 0']
    #allocation3 [shape = 'u8[32768]{0}', space=vmem, size = 0x8000, scoped, tag = 'input window, operand 1']
    #allocation4 [shape = 'u8[32768]{0}', space=vmem, size = 0x8000, scoped, tag = 'input window, operand 2']
    #allocation5 [shape = 'u8[32768]{0}', space=vmem, size = 0x8000, scoped, tag = 'output window, operand 0']
    #allocation6 [shape = 's32[2]{0}', space=sflag, size = 0x8, scoped, tag = 'scoped memory for wrapper_forward.1']
    %16 = vsyncpa [#allocation6], 0
    %s17 = scalar_lea.sflag [#allocation6], 1
    %18 = vsyncpa %s17, 0
    loop: start=0, step=1, limit=6
    $region2: #{wrapper_forward.1} parent=1 // loop_pre_header
      _
    $region3: #{wrapper_forward.1} parent=1 // loop_header
      %s20 = sphi 0, %s24
      %p21 = scmp.ge.s32.totalorder %s20, 6
      %s27 = sphi 0, %s39
      %s28 = sphi 0, %s35
      %s29 = sphi 0, %s27
      %s30 = sphi 0, %s28
      %s31 = sphi 0, %s29
      %s32 = sphi 0, %s30
      %s44 = sphi 0, %s46
      %s47 = sphi 0, %s44
      %s48 = sphi 0, %s47
      %s64 = sphi 0, %s48
      %s72 = sphi 0, %s74
      %s75 = sphi 0, %s72
      %s76 = sphi 0, %s75
      %s92 = sphi 0, %s76
      %s100 = sphi 0, %s102
      %s103 = sphi 0, %s100
      %s104 = sphi 0, %s103
      %s120 = sphi 0, %s104
      %s128 = sphi 0, %s130
      %s131 = sphi 0, %s128
      %s132 = sphi 0, %s131
      %s148 = sphi 0, %s132
      %s156 = sphi 0, %s158
      %s159 = sphi 0, %s156
      %s160 = sphi 0, %s159
      %s176 = sphi 0, %s160
      %s182 = sphi 0, %s184
      %s185 = sphi 0, %s182
      %s186 = sphi 0, %s185
      %s202 = sphi 0, %s186
      %s208 = sphi 0, %s210
      %s211 = sphi 0, %s208
      %s212 = sphi 0, %s211
      %s228 = sphi 0, %s212
      %s232 = sphi 0, %s232
      %s234 = sphi 0, %s232
      %s235 = sphi 0, %s234
      %s249 = sphi 0, %s235
      %s253 = sphi 0, %s253
      %s255 = sphi 0, %s253
      %s256 = sphi 0, %s255
      %s270 = sphi 0, %s256
      %s274 = sphi 0, %s274
      %s276 = sphi 0, %s274
      %s277 = sphi 0, %s276
      %s291 = sphi 0, %s277
      %s295 = sphi 0, %s295
      %s297 = sphi 0, %s295
      %s298 = sphi 0, %s297
      %s312 = sphi 0, %s298
      %s320 = sphi 0, %s322
      %s323 = sphi 0, %s320
      %s324 = sphi 0, %s323
      %s340 = sphi 0, %s324
    $region4: #{wrapper_forward.1} parent=1 // loop_header_branch
      %23 = sbr.rel (%p21) target = $region8
    $region5: #{wrapper_forward.1} parent=1 // loop_body
      %s25 = ssub.s32 %s20, 1
      %s26 = ssub.s32 %s20, 2
      %s33 = sadd.s32 1, %s28
      %p34 = scmp.ge.s32.totalorder %s33, 2
      %s35 = scalar_select %p34, 0, %s33
      %s36 = sadd.s32 1, %s27
      %s37 = scalar_select %p34, %s36, %s27
      %p38 = scmp.ge.s32.totalorder %s37, 2
      %s39 = scalar_select %p38, 0, %s37
      %s40 = ssub.s32 %s27, %s39
      %s41 = ssub.s32 %s28, %s35
      %s42 = sor.u32 %s40, %s41
      %p43 = scmp.eq.s32.totalorder %s42, 0
      %s45 = sadd.s32 %s44, 1
      %s46 = scalar_select %p43, %s44, %s45
      %p49 = pneg %p43
      %p50 = scmp.eq.s32.totalorder %s20, 3
      %p51 = por %p49, %p50
      %p52 = scmp.ne.s32.totalorder %s44, %s47
      %p53 = scmp.eq.s32.totalorder %s20, 0
      %p54 = por %p52, %p53
      %p55 = scmp.ne.s32.totalorder %s44, %s47
      %p56 = scmp.eq.s32.totalorder %s25, 3
      %p57 = por %p55, %p56
      %p58 = scmp.ne.s32.totalorder %s47, %s48
      %p59 = scmp.eq.s32.totalorder %s25, 0
      %p60 = por %p58, %p59
      %p61 = scmp.ne.s32.totalorder %s47, %s48
      %p62 = scmp.eq.s32.totalorder %s26, 3
      %p63 = por %p61, %p62
      %p65 = scmp.ne.s32.totalorder %s48, %s64
      %p66 = scmp.eq.s32.totalorder %s26, 0
      %p67 = por %p65, %p66
      %s68 = ssub.s32 %s27, %s39
      %s69 = ssub.s32 %s28, %s35
      %s70 = sor.u32 %s68, %s69
      %p71 = scmp.eq.s32.totalorder %s70, 0
      %s73 = sadd.s32 %s72, 1
      %s74 = scalar_select %p71, %s72, %s73
      %p77 = pneg %p71
      %p78 = scmp.eq.s32.totalorder %s20, 3
      %p79 = por %p77, %p78
      %p80 = scmp.ne.s32.totalorder %s72, %s75
      %p81 = scmp.eq.s32.totalorder %s20, 0
      %p82 = por %p80, %p81
      %p83 = scmp.ne.s32.totalorder %s72, %s75
      %p84 = scmp.eq.s32.totalorder %s25, 3
      %p85 = por %p83, %p84
      %p86 = scmp.ne.s32.totalorder %s75, %s76
      %p87 = scmp.eq.s32.totalorder %s25, 0
      %p88 = por %p86, %p87
      %p89 = scmp.ne.s32.totalorder %s75, %s76
      %p90 = scmp.eq.s32.totalorder %s26, 3
      %p91 = por %p89, %p90
      %p93 = scmp.ne.s32.totalorder %s76, %s92
      %p94 = scmp.eq.s32.totalorder %s26, 0
      %p95 = por %p93, %p94
      %s96 = ssub.s32 %s27, %s39
      %s97 = ssub.s32 %s28, %s35
      %s98 = sor.u32 %s96, %s97
      %p99 = scmp.eq.s32.totalorder %s98, 0
      %s101 = sadd.s32 %s100, 1
      %s102 = scalar_select %p99, %s100, %s101
      %p105 = pneg %p99
      %p106 = scmp.eq.s32.totalorder %s20, 3
      %p107 = por %p105, %p106
      %p108 = scmp.ne.s32.totalorder %s100, %s103
      %p109 = scmp.eq.s32.totalorder %s20, 0
      %p110 = por %p108, %p109
      %p111 = scmp.ne.s32.totalorder %s100, %s103
      %p112 = scmp.eq.s32.totalorder %s25, 3
      %p113 = por %p111, %p112
      %p114 = scmp.ne.s32.totalorder %s103, %s104
      %p115 = scmp.eq.s32.totalorder %s25, 0
      %p116 = por %p114, %p115
      %p117 = scmp.ne.s32.totalorder %s103, %s104
      %p118 = scmp.eq.s32.totalorder %s26, 3
      %p119 = por %p117, %p118
      %p121 = scmp.ne.s32.totalorder %s104, %s120
      %p122 = scmp.eq.s32.totalorder %s26, 0
      %p123 = por %p121, %p122
      %s124 = ssub.s32 %s27, %s39
      %s125 = ssub.s32 %s28, %s35
      %s126 = sor.u32 %s124, %s125
      %p127 = scmp.eq.s32.totalorder %s126, 0
      %s129 = sadd.s32 %s128, 1
      %s130 = scalar_select %p127, %s128, %s129
      %p133 = pneg %p127
      %p134 = scmp.eq.s32.totalorder %s20, 3
      %p135 = por %p133, %p134
      %p136 = scmp.ne.s32.totalorder %s128, %s131
      %p137 = scmp.eq.s32.totalorder %s20, 0
      %p138 = por %p136, %p137
      %p139 = scmp.ne.s32.totalorder %s128, %s131
      %p140 = scmp.eq.s32.totalorder %s25, 3
      %p141 = por %p139, %p140
      %p142 = scmp.ne.s32.totalorder %s131, %s132
      %p143 = scmp.eq.s32.totalorder %s25, 0
      %p144 = por %p142, %p143
      %p145 = scmp.ne.s32.totalorder %s131, %s132
      %p146 = scmp.eq.s32.totalorder %s26, 3
      %p147 = por %p145, %p146
      %p149 = scmp.ne.s32.totalorder %s132, %s148
      %p150 = scmp.eq.s32.totalorder %s26, 0
      %p151 = por %p149, %p150
      %s152 = ssub.s32 %s27, %s39
      %s153 = ssub.s32 %s28, %s35
      %s154 = sor.u32 %s152, %s153
      %p155 = scmp.eq.s32.totalorder %s154, 0
      %s157 = sadd.s32 %s156, 1
      %s158 = scalar_select %p155, %s156, %s157
      %p161 = pneg %p155
      %p162 = scmp.eq.s32.totalorder %s20, 3
      %p163 = por %p161, %p162
      %p164 = scmp.ne.s32.totalorder %s156, %s159
      %p165 = scmp.eq.s32.totalorder %s20, 0
      %p166 = por %p164, %p165
      %p167 = scmp.ne.s32.totalorder %s156, %s159
      %p168 = scmp.eq.s32.totalorder %s25, 3
      %p169 = por %p167, %p168
      %p170 = scmp.ne.s32.totalorder %s159, %s160
      %p171 = scmp.eq.s32.totalorder %s25, 0
      %p172 = por %p170, %p171
      %p173 = scmp.ne.s32.totalorder %s159, %s160
      %p174 = scmp.eq.s32.totalorder %s26, 3
      %p175 = por %p173, %p174
      %p177 = scmp.ne.s32.totalorder %s160, %s176
      %p178 = scmp.eq.s32.totalorder %s26, 0
      %p179 = por %p177, %p178
      %s180 = ssub.s32 %s27, %s39
      %p181 = scmp.eq.s32.totalorder %s180, 0
      %s183 = sadd.s32 %s182, 1
      %s184 = scalar_select %p181, %s182, %s183
      %p187 = pneg %p181
      %p188 = scmp.eq.s32.totalorder %s20, 3
      %p189 = por %p187, %p188
      %p190 = scmp.ne.s32.totalorder %s182, %s185
      %p191 = scmp.eq.s32.totalorder %s20, 0
      %p192 = por %p190, %p191
      %p193 = scmp.ne.s32.totalorder %s182, %s185
      %p194 = scmp.eq.s32.totalorder %s25, 3
      %p195 = por %p193, %p194
      %p196 = scmp.ne.s32.totalorder %s185, %s186
      %p197 = scmp.eq.s32.totalorder %s25, 0
      %p198 = por %p196, %p197
      %p199 = scmp.ne.s32.totalorder %s185, %s186
      %p200 = scmp.eq.s32.totalorder %s26, 3
      %p201 = por %p199, %p200
      %p203 = scmp.ne.s32.totalorder %s186, %s202
      %p204 = scmp.eq.s32.totalorder %s26, 0
      %p205 = por %p203, %p204
      %s206 = ssub.s32 %s27, %s39
      %p207 = scmp.eq.s32.totalorder %s206, 0
      %s209 = sadd.s32 %s208, 1
      %s210 = scalar_select %p207, %s208, %s209
      %p213 = pneg %p207
      %p214 = scmp.eq.s32.totalorder %s20, 3
      %p215 = por %p213, %p214
      %p216 = scmp.ne.s32.totalorder %s208, %s211
      %p217 = scmp.eq.s32.totalorder %s20, 0
      %p218 = por %p216, %p217
      %p219 = scmp.ne.s32.totalorder %s208, %s211
      %p220 = scmp.eq.s32.totalorder %s25, 3
      %p221 = por %p219, %p220
      %p222 = scmp.ne.s32.totalorder %s211, %s212
      %p223 = scmp.eq.s32.totalorder %s25, 0
      %p224 = por %p222, %p223
      %p225 = scmp.ne.s32.totalorder %s211, %s212
      %p226 = scmp.eq.s32.totalorder %s26, 3
      %p227 = por %p225, %p226
      %p229 = scmp.ne.s32.totalorder %s212, %s228
      %p230 = scmp.eq.s32.totalorder %s26, 0
      %p231 = por %p229, %p230
      %s233 = sadd.s32 %s232, 1
      %p236 = scmp.eq.s32.totalorder %s20, 3
      %p237 = scmp.ne.s32.totalorder %s232, %s234
      %p238 = scmp.eq.s32.totalorder %s20, 0
      %p239 = por %p237, %p238
      %p240 = scmp.ne.s32.totalorder %s232, %s234
      %p241 = scmp.eq.s32.totalorder %s25, 3
      %p242 = por %p240, %p241
      %p243 = scmp.ne.s32.totalorder %s234, %s235
      %p244 = scmp.eq.s32.totalorder %s25, 0
      %p245 = por %p243, %p244
      %p246 = scmp.ne.s32.totalorder %s234, %s235
      %p247 = scmp.eq.s32.totalorder %s26, 3
      %p248 = por %p246, %p247
      %p250 = scmp.ne.s32.totalorder %s235, %s249
      %p251 = scmp.eq.s32.totalorder %s26, 0
      %p252 = por %p250, %p251
      %s254 = sadd.s32 %s253, 1
      %p257 = scmp.eq.s32.totalorder %s20, 3
      %p258 = scmp.ne.s32.totalorder %s253, %s255
      %p259 = scmp.eq.s32.totalorder %s20, 0
      %p260 = por %p258, %p259
      %p261 = scmp.ne.s32.totalorder %s253, %s255
      %p262 = scmp.eq.s32.totalorder %s25, 3
      %p263 = por %p261, %p262
      %p264 = scmp.ne.s32.totalorder %s255, %s256
      %p265 = scmp.eq.s32.totalorder %s25, 0
      %p266 = por %p264, %p265
      %p267 = scmp.ne.s32.totalorder %s255, %s256
      %p268 = scmp.eq.s32.totalorder %s26, 3
      %p269 = por %p267, %p268
      %p271 = scmp.ne.s32.totalorder %s256, %s270
      %p272 = scmp.eq.s32.totalorder %s26, 0
      %p273 = por %p271, %p272
      %s275 = sadd.s32 %s274, 1
      %p278 = scmp.eq.s32.totalorder %s20, 3
      %p279 = scmp.ne.s32.totalorder %s274, %s276
      %p280 = scmp.eq.s32.totalorder %s20, 0
      %p281 = por %p279, %p280
      %p282 = scmp.ne.s32.totalorder %s274, %s276
      %p283 = scmp.eq.s32.totalorder %s25, 3
      %p284 = por %p282, %p283
      %p285 = scmp.ne.s32.totalorder %s276, %s277
      %p286 = scmp.eq.s32.totalorder %s25, 0
      %p287 = por %p285, %p286
      %p288 = scmp.ne.s32.totalorder %s276, %s277
      %p289 = scmp.eq.s32.totalorder %s26, 3
      %p290 = por %p288, %p289
      %p292 = scmp.ne.s32.totalorder %s277, %s291
      %p293 = scmp.eq.s32.totalorder %s26, 0
      %p294 = por %p292, %p293
      %s296 = sadd.s32 %s295, 1
      %p299 = scmp.eq.s32.totalorder %s20, 3
      %p300 = scmp.ne.s32.totalorder %s295, %s297
      %p301 = scmp.eq.s32.totalorder %s20, 0
      %p302 = por %p300, %p301
      %p303 = scmp.ne.s32.totalorder %s295, %s297
      %p304 = scmp.eq.s32.totalorder %s25, 3
      %p305 = por %p303, %p304
      %p306 = scmp.ne.s32.totalorder %s297, %s298
      %p307 = scmp.eq.s32.totalorder %s25, 0
      %p308 = por %p306, %p307
      %p309 = scmp.ne.s32.totalorder %s297, %s298
      %p310 = scmp.eq.s32.totalorder %s26, 3
      %p311 = por %p309, %p310
      %p313 = scmp.ne.s32.totalorder %s298, %s312
      %p314 = scmp.eq.s32.totalorder %s26, 0
      %p315 = por %p313, %p314
      %s316 = ssub.s32 %s27, %s39
      %s317 = ssub.s32 %s28, %s35
      %s318 = sor.u32 %s316, %s317
      %p319 = scmp.eq.s32.totalorder %s318, 0
      %s321 = sadd.s32 %s320, 1
      %s322 = scalar_select %p319, %s320, %s321
      %p325 = pneg %p319
      %p326 = scmp.eq.s32.totalorder %s20, 3
      %p327 = por %p325, %p326
      %p328 = scmp.ne.s32.totalorder %s320, %s323
      %p329 = scmp.eq.s32.totalorder %s20, 0
      %p330 = por %p328, %p329
      %p331 = scmp.ne.s32.totalorder %s320, %s323
      %p332 = scmp.eq.s32.totalorder %s25, 3
      %p333 = por %p331, %p332
      %p334 = scmp.ne.s32.totalorder %s323, %s324
      %p335 = scmp.eq.s32.totalorder %s25, 0
      %p336 = por %p334, %p335
      %p337 = scmp.ne.s32.totalorder %s323, %s324
      %p338 = scmp.eq.s32.totalorder %s26, 3
      %p339 = por %p337, %p338
      %p341 = scmp.ne.s32.totalorder %s324, %s340
      %p342 = scmp.eq.s32.totalorder %s26, 0
      %p343 = por %p341, %p342
      %p344 = scmp.le.s32.totalorder 1, %s20
      %p345 = scmp.lt.s32.totalorder %s20, 5
      %p346 = pnand %p344, %p345
      %p347 = pneg %p346
      // Predicated region
      $region9: #{wrapper_forward.1} parent=5 // pred_check
        _
      $region10: #{wrapper_forward.1} parent=5 // pred_check_branch
        %349 = sbr.rel (%p346) target = $region12
      $region11: #{wrapper_forward.1} parent=5 // pred_region
        %s350 = ssub.s32 %s20, 1
        // Predicated region
        $region13: #{wrapper_forward.1} parent=11 // pred_check
          %p351 = pneg %p245
        $region14: #{wrapper_forward.1} parent=11 // pred_check_branch
          %353 = sbr.rel (%p351) target = $region16
        $region15: #{wrapper_forward.1} parent=11 // pred_region
          _
        $region16: #{wrapper_forward.1} parent=11 // pred_fallthru
          _
        // Predicated region
        $region17: #{wrapper_forward.1} parent=11 // pred_check
          %p354 = pneg %p266
        $region18: #{wrapper_forward.1} parent=11 // pred_check_branch
          %356 = sbr.rel (%p354) target = $region20
        $region19: #{wrapper_forward.1} parent=11 // pred_region
          _
        $region20: #{wrapper_forward.1} parent=11 // pred_fallthru
          _
        // Predicated region
        $region21: #{wrapper_forward.1} parent=11 // pred_check
          %p357 = pneg %p287
        $region22: #{wrapper_forward.1} parent=11 // pred_check_branch
          %359 = sbr.rel (%p357) target = $region24
        $region23: #{wrapper_forward.1} parent=11 // pred_region
          _
        $region24: #{wrapper_forward.1} parent=11 // pred_fallthru
          _
        // Predicated region
        $region25: #{wrapper_forward.1} parent=11 // pred_check
          %p360 = pneg %p308
        $region26: #{wrapper_forward.1} parent=11 // pred_check_branch
          %362 = sbr.rel (%p360) target = $region28
        $region27: #{wrapper_forward.1} parent=11 // pred_region
          _
        $region28: #{wrapper_forward.1} parent=11 // pred_fallthru
          _
      $region12: #{wrapper_forward.1} parent=5 // pred_fallthru
        _
      %p363 = scmp.lt.s32.totalorder %s20, 4
      // Predicated region
      $region29: #{wrapper_forward.1} parent=5 // pred_check
        %p364 = pneg %p363
      $region30: #{wrapper_forward.1} parent=5 // pred_check_branch
        %366 = sbr.rel (%p364) target = $region32
      $region31: #{wrapper_forward.1} parent=5 // pred_region
        // Predicated region
        $region33: #{wrapper_forward.1} parent=31 // pred_check
          %p367 = pneg %p54
        $region34: #{wrapper_forward.1} parent=31 // pred_check_branch
          %369 = sbr.rel (%p367) target = $region36
        $region35: #{wrapper_forward.1} parent=31 // pred_region
          %s370 = sand.u32 %s44, 1
          %s371 = sand.u32 %s44, 1
          %s372 = smul.addr %s371, 32
          %s373 = scalar_lea.vmem [#allocation2], %s372
          %s374 = smul.addr %s27, 8
          %s375 = sadd.s32 %s28, %s374
          %s376 = smul.addr %s375, 8
          %s377 = scalar_lea.vmem %s0, %s376
          // Predicated region
          $region37: #{wrapper_forward.1} parent=35 // pred_check
            _
          $region38: #{wrapper_forward.1} parent=35 // pred_check_branch
            %379 = sbr.rel (0) target = $region40
          $region39: #{wrapper_forward.1} parent=35 // pred_region
            // Predicated region
            $region41: #{wrapper_forward.1} parent=39 // pred_check
              _
            $region42: #{wrapper_forward.1} parent=39 // pred_check_branch
              %381 = sbr.rel (0) target = $region44
            $region43: #{wrapper_forward.1} parent=39 // pred_region
              // Predicated region
              $region56: #{wrapper_forward.1} parent=43 // pred_check
                _
              $region57: #{wrapper_forward.1} parent=43 // pred_check_branch
                %402 = sbr.rel (0) target = $region59
              $region58: #{wrapper_forward.1} parent=43 // pred_region
                loop: start=0, step=1, limit=1
                $region60: #{wrapper_forward.1} parent=58 // loop_pre_header
                  _
                $region61: #{wrapper_forward.1} parent=58 // loop_header
                  %s404 = sphi 0, %s408
                  %p405 = scmp.ge.s32.totalorder %s404, 1
                  %s409 = sphi %s377, %s377
                  %s410 = sphi %s373, %s373
                $region62: #{wrapper_forward.1} parent=58 // loop_header_branch
                  %407 = sbr.rel (%p405) target = $region66
                $region63: #{wrapper_forward.1} parent=58 // loop_body
                  %v411 = vld [vmem:[%s409] sm:$0xff]
                  %412 = vst [vmem:[%s410] sm:$0xff] %v411
                  %v413 = vld [vmem:[%s409 + $0x10] sm:$0xff]
                  %414 = vst [vmem:[%s410 + $0x8] sm:$0xff] %v413
                  %v415 = vld [vmem:[%s409 + $0x20] sm:$0xff]
                  %416 = vst [vmem:[%s410 + $0x10] sm:$0xff] %v415
                  %v417 = vld [vmem:[%s409 + $0x30] sm:$0xff]
                  %418 = vst [vmem:[%s410 + $0x18] sm:$0xff] %v417
                $region64: #{wrapper_forward.1} parent=58 // loop_footer
                  %s408 = sadd.s32 1, %s404
                $region65: #{wrapper_forward.1} parent=58 // loop_footer_branch
                  %403 = sbr.rel target = $region61
                $region66: #{wrapper_forward.1} parent=58 // loop_exit
                  _
              $region59: #{wrapper_forward.1} parent=43 // pred_fallthru
                _
              // Predicated region
              $region67: #{wrapper_forward.1} parent=43 // pred_check
                _
              $region68: #{wrapper_forward.1} parent=43 // pred_check_branch
                %420 = sbr.rel target = $region70
              $region69: #{wrapper_forward.1} parent=43 // pred_region
                _
              $region70: #{wrapper_forward.1} parent=43 // pred_fallthru
                _
            $region44: #{wrapper_forward.1} parent=39 // pred_fallthru
              _
            // Predicated region
            $region45: #{wrapper_forward.1} parent=39 // pred_check
              _
            $region46: #{wrapper_forward.1} parent=39 // pred_check_branch
              %383 = sbr.rel target = $region48
            $region47: #{wrapper_forward.1} parent=39 // pred_region
              loop: start=0, step=1, limit=1
              $region49: #{wrapper_forward.1} parent=47 // loop_pre_header
                _
              $region50: #{wrapper_forward.1} parent=47 // loop_header
                %s386 = sphi 0, %s390
                %p387 = scmp.ge.s32.totalorder %s386, 1
                %s391 = sphi %s377, %s377
                %s392 = sphi %s373, %s373
              $region51: #{wrapper_forward.1} parent=47 // loop_header_branch
                %389 = sbr.rel (%p387) target = $region55
              $region52: #{wrapper_forward.1} parent=47 // loop_body
                %v393 = vld [vmem:[%s391] sm:$0xff]
                %394 = vst [vmem:[%s392] sm:$0xff] %v393
                %v395 = vld [vmem:[%s391 + $0x10] sm:$0xff]
                %396 = vst [vmem:[%s392 + $0x8] sm:$0xff] %v395
                %v397 = vld [vmem:[%s391 + $0x20] sm:$0xff]
                %398 = vst [vmem:[%s392 + $0x10] sm:$0xff] %v397
                %v399 = vld [vmem:[%s391 + $0x30] sm:$0xff]
                %400 = vst [vmem:[%s392 + $0x18] sm:$0xff] %v399
              $region53: #{wrapper_forward.1} parent=47 // loop_footer
                %s390 = sadd.s32 1, %s386
              $region54: #{wrapper_forward.1} parent=47 // loop_footer_branch
                %385 = sbr.rel target = $region50
              $region55: #{wrapper_forward.1} parent=47 // loop_exit
                _
            $region48: #{wrapper_forward.1} parent=39 // pred_fallthru
              _
          $region40: #{wrapper_forward.1} parent=35 // pred_fallthru
            _
          %421 = vnop
        $region36: #{wrapper_forward.1} parent=31 // pred_fallthru
          _
        // Predicated region
        $region71: #{wrapper_forward.1} parent=31 // pred_check
          %p422 = pneg %p82
        $region72: #{wrapper_forward.1} parent=31 // pred_check_branch
          %424 = sbr.rel (%p422) target = $region74
        $region73: #{wrapper_forward.1} parent=31 // pred_region
          %s425 = sand.u32 %s72, 1
          %s426 = sand.u32 %s72, 1
          %s427 = smul.addr %s426, 32
          %s428 = scalar_lea.vmem [#allocation3], %s427
          %s429 = smul.addr %s27, 8
          %s430 = sadd.s32 %s28, %s429
          %s431 = smul.addr %s430, 8
          %s432 = scalar_lea.vmem %s1, %s431
          // Predicated region
          $region75: #{wrapper_forward.1} parent=73 // pred_check
            _
          $region76: #{wrapper_forward.1} parent=73 // pred_check_branch
            %434 = sbr.rel (0) target = $region78
          $region77: #{wrapper_forward.1} parent=73 // pred_region
            // Predicated region
            $region79: #{wrapper_forward.1} parent=77 // pred_check
              _
            $region80: #{wrapper_forward.1} parent=77 // pred_check_branch
              %436 = sbr.rel (0) target = $region82
            $region81: #{wrapper_forward.1} parent=77 // pred_region
              // Predicated region
              $region94: #{wrapper_forward.1} parent=81 // pred_check
                _
              $region95: #{wrapper_forward.1} parent=81 // pred_check_branch
                %457 = sbr.rel (0) target = $region97
              $region96: #{wrapper_forward.1} parent=81 // pred_region
                loop: start=0, step=1, limit=1
                $region98: #{wrapper_forward.1} parent=96 // loop_pre_header
                  _
                $region99: #{wrapper_forward.1} parent=96 // loop_header
                  %s459 = sphi 0, %s463
                  %p460 = scmp.ge.s32.totalorder %s459, 1
                  %s464 = sphi %s432, %s432
                  %s465 = sphi %s428, %s428
                $region100: #{wrapper_forward.1} parent=96 // loop_header_branch
                  %462 = sbr.rel (%p460) target = $region104
                $region101: #{wrapper_forward.1} parent=96 // loop_body
                  %v466 = vld [vmem:[%s464] sm:$0xff]
                  %467 = vst [vmem:[%s465] sm:$0xff] %v466
                  %v468 = vld [vmem:[%s464 + $0x10] sm:$0xff]
                  %469 = vst [vmem:[%s465 + $0x8] sm:$0xff] %v468
                  %v470 = vld [vmem:[%s464 + $0x20] sm:$0xff]
                  %471 = vst [vmem:[%s465 + $0x10] sm:$0xff] %v470
                  %v472 = vld [vmem:[%s464 + $0x30] sm:$0xff]
                  %473 = vst [vmem:[%s465 + $0x18] sm:$0xff] %v472
                $region102: #{wrapper_forward.1} parent=96 // loop_footer
                  %s463 = sadd.s32 1, %s459
                $region103: #{wrapper_forward.1} parent=96 // loop_footer_branch
                  %458 = sbr.rel target = $region99
                $region104: #{wrapper_forward.1} parent=96 // loop_exit
                  _
              $region97: #{wrapper_forward.1} parent=81 // pred_fallthru
                _
              // Predicated region
              $region105: #{wrapper_forward.1} parent=81 // pred_check
                _
              $region106: #{wrapper_forward.1} parent=81 // pred_check_branch
                %475 = sbr.rel target = $region108
              $region107: #{wrapper_forward.1} parent=81 // pred_region
                _
              $region108: #{wrapper_forward.1} parent=81 // pred_fallthru
                _
            $region82: #{wrapper_forward.1} parent=77 // pred_fallthru
              _
            // Predicated region
            $region83: #{wrapper_forward.1} parent=77 // pred_check
              _
            $region84: #{wrapper_forward.1} parent=77 // pred_check_branch
              %438 = sbr.rel target = $region86
            $region85: #{wrapper_forward.1} parent=77 // pred_region
              loop: start=0, step=1, limit=1
              $region87: #{wrapper_forward.1} parent=85 // loop_pre_header
                _
              $region88: #{wrapper_forward.1} parent=85 // loop_header
                %s441 = sphi 0, %s445
                %p442 = scmp.ge.s32.totalorder %s441, 1
                %s446 = sphi %s432, %s432
                %s447 = sphi %s428, %s428
              $region89: #{wrapper_forward.1} parent=85 // loop_header_branch
                %444 = sbr.rel (%p442) target = $region93
              $region90: #{wrapper_forward.1} parent=85 // loop_body
                %v448 = vld [vmem:[%s446] sm:$0xff]
                %449 = vst [vmem:[%s447] sm:$0xff] %v448
                %v450 = vld [vmem:[%s446 + $0x10] sm:$0xff]
                %451 = vst [vmem:[%s447 + $0x8] sm:$0xff] %v450
                %v452 = vld [vmem:[%s446 + $0x20] sm:$0xff]
                %453 = vst [vmem:[%s447 + $0x10] sm:$0xff] %v452
                %v454 = vld [vmem:[%s446 + $0x30] sm:$0xff]
                %455 = vst [vmem:[%s447 + $0x18] sm:$0xff] %v454
              $region91: #{wrapper_forward.1} parent=85 // loop_footer
                %s445 = sadd.s32 1, %s441
              $region92: #{wrapper_forward.1} parent=85 // loop_footer_branch
                %440 = sbr.rel target = $region88
              $region93: #{wrapper_forward.1} parent=85 // loop_exit
                _
            $region86: #{wrapper_forward.1} parent=77 // pred_fallthru
              _
          $region78: #{wrapper_forward.1} parent=73 // pred_fallthru
            _
          %476 = vnop
        $region74: #{wrapper_forward.1} parent=31 // pred_fallthru
          _
        // Predicated region
        $region109: #{wrapper_forward.1} parent=31 // pred_check
          %p477 = pneg %p110
        $region110: #{wrapper_forward.1} parent=31 // pred_check_branch
          %479 = sbr.rel (%p477) target = $region112
        $region111: #{wrapper_forward.1} parent=31 // pred_region
          %s480 = sand.u32 %s100, 1
          %s481 = sand.u32 %s100, 1
          %s482 = smul.addr %s481, 32
          %s483 = scalar_lea.vmem [#allocation4], %s482
          %s484 = smul.addr %s27, 8
          %s485 = sadd.s32 %s28, %s484
          %s486 = smul.addr %s485, 8
          %s487 = scalar_lea.vmem %s2, %s486
          // Predicated region
          $region113: #{wrapper_forward.1} parent=111 // pred_check
            _
          $region114: #{wrapper_forward.1} parent=111 // pred_check_branch
            %489 = sbr.rel (0) target = $region116
          $region115: #{wrapper_forward.1} parent=111 // pred_region
            // Predicated region
            $region117: #{wrapper_forward.1} parent=115 // pred_check
              _
            $region118: #{wrapper_forward.1} parent=115 // pred_check_branch
              %491 = sbr.rel (0) target = $region120
            $region119: #{wrapper_forward.1} parent=115 // pred_region
              // Predicated region
              $region132: #{wrapper_forward.1} parent=119 // pred_check
                _
              $region133: #{wrapper_forward.1} parent=119 // pred_check_branch
                %512 = sbr.rel (0) target = $region135
              $region134: #{wrapper_forward.1} parent=119 // pred_region
                loop: start=0, step=1, limit=1
                $region136: #{wrapper_forward.1} parent=134 // loop_pre_header
                  _
                $region137: #{wrapper_forward.1} parent=134 // loop_header
                  %s514 = sphi 0, %s518
                  %p515 = scmp.ge.s32.totalorder %s514, 1
                  %s519 = sphi %s487, %s487
                  %s520 = sphi %s483, %s483
                $region138: #{wrapper_forward.1} parent=134 // loop_header_branch
                  %517 = sbr.rel (%p515) target = $region142
                $region139: #{wrapper_forward.1} parent=134 // loop_body
                  %v521 = vld [vmem:[%s519] sm:$0xff]
                  %522 = vst [vmem:[%s520] sm:$0xff] %v521
                  %v523 = vld [vmem:[%s519 + $0x10] sm:$0xff]
                  %524 = vst [vmem:[%s520 + $0x8] sm:$0xff] %v523
                  %v525 = vld [vmem:[%s519 + $0x20] sm:$0xff]
                  %526 = vst [vmem:[%s520 + $0x10] sm:$0xff] %v525
                  %v527 = vld [vmem:[%s519 + $0x30] sm:$0xff]
                  %528 = vst [vmem:[%s520 + $0x18] sm:$0xff] %v527
                $region140: #{wrapper_forward.1} parent=134 // loop_footer
                  %s518 = sadd.s32 1, %s514
                $region141: #{wrapper_forward.1} parent=134 // loop_footer_branch
                  %513 = sbr.rel target = $region137
                $region142: #{wrapper_forward.1} parent=134 // loop_exit
                  _
              $region135: #{wrapper_forward.1} parent=119 // pred_fallthru
                _
              // Predicated region
              $region143: #{wrapper_forward.1} parent=119 // pred_check
                _
              $region144: #{wrapper_forward.1} parent=119 // pred_check_branch
                %530 = sbr.rel target = $region146
              $region145: #{wrapper_forward.1} parent=119 // pred_region
                _
              $region146: #{wrapper_forward.1} parent=119 // pred_fallthru
                _
            $region120: #{wrapper_forward.1} parent=115 // pred_fallthru
              _
            // Predicated region
            $region121: #{wrapper_forward.1} parent=115 // pred_check
              _
            $region122: #{wrapper_forward.1} parent=115 // pred_check_branch
              %493 = sbr.rel target = $region124
            $region123: #{wrapper_forward.1} parent=115 // pred_region
              loop: start=0, step=1, limit=1
              $region125: #{wrapper_forward.1} parent=123 // loop_pre_header
                _
              $region126: #{wrapper_forward.1} parent=123 // loop_header
                %s496 = sphi 0, %s500
                %p497 = scmp.ge.s32.totalorder %s496, 1
                %s501 = sphi %s487, %s487
                %s502 = sphi %s483, %s483
              $region127: #{wrapper_forward.1} parent=123 // loop_header_branch
                %499 = sbr.rel (%p497) target = $region131
              $region128: #{wrapper_forward.1} parent=123 // loop_body
                %v503 = vld [vmem:[%s501] sm:$0xff]
                %504 = vst [vmem:[%s502] sm:$0xff] %v503
                %v505 = vld [vmem:[%s501 + $0x10] sm:$0xff]
                %506 = vst [vmem:[%s502 + $0x8] sm:$0xff] %v505
                %v507 = vld [vmem:[%s501 + $0x20] sm:$0xff]
                %508 = vst [vmem:[%s502 + $0x10] sm:$0xff] %v507
                %v509 = vld [vmem:[%s501 + $0x30] sm:$0xff]
                %510 = vst [vmem:[%s502 + $0x18] sm:$0xff] %v509
              $region129: #{wrapper_forward.1} parent=123 // loop_footer
                %s500 = sadd.s32 1, %s496
              $region130: #{wrapper_forward.1} parent=123 // loop_footer_branch
                %495 = sbr.rel target = $region126
              $region131: #{wrapper_forward.1} parent=123 // loop_exit
                _
            $region124: #{wrapper_forward.1} parent=115 // pred_fallthru
              _
          $region116: #{wrapper_forward.1} parent=111 // pred_fallthru
            _
          %531 = vnop
        $region112: #{wrapper_forward.1} parent=31 // pred_fallthru
          _
        // Predicated region
        $region147: #{wrapper_forward.1} parent=31 // pred_check
          %p532 = pneg %p138
        $region148: #{wrapper_forward.1} parent=31 // pred_check_branch
          %534 = sbr.rel (%p532) target = $region150
        $region149: #{wrapper_forward.1} parent=31 // pred_region
          %p535 = scmp.lt.s32.totalorder %s27, 1
          %s536 = scalar_select %p535, %s27, 1
          %p537 = scmp.lt.s32.totalorder %s28, 1
          %s538 = scalar_select %p537, %s28, 1
          %s539 = smul.addr %s536, 2
          %s540 = sadd.s32 %s538, %s539
          %s541 = scalar_lea.vmem %s3, %s540
        $region150: #{wrapper_forward.1} parent=31 // pred_fallthru
          _
        // Predicated region
        $region151: #{wrapper_forward.1} parent=31 // pred_check
          %p542 = pneg %p166
        $region152: #{wrapper_forward.1} parent=31 // pred_check_branch
          %544 = sbr.rel (%p542) target = $region154
        $region153: #{wrapper_forward.1} parent=31 // pred_region
          %p545 = scmp.lt.s32.totalorder %s27, 1
          %s546 = scalar_select %p545, %s27, 1
          %p547 = scmp.lt.s32.totalorder %s28, 1
          %s548 = scalar_select %p547, %s28, 1
          %s549 = smul.addr %s546, 2
          %s550 = sadd.s32 %s548, %s549
          %s551 = scalar_lea.vmem %s4, %s550
        $region154: #{wrapper_forward.1} parent=31 // pred_fallthru
          _
        // Predicated region
        $region155: #{wrapper_forward.1} parent=31 // pred_check
          %p552 = pneg %p192
        $region156: #{wrapper_forward.1} parent=31 // pred_check_branch
          %554 = sbr.rel (%p552) target = $region158
        $region157: #{wrapper_forward.1} parent=31 // pred_region
          %p555 = scmp.lt.s32.totalorder %s27, 1
          %s556 = scalar_select %p555, %s27, 1
          %s557 = smul.addr %s556, 8
          %s558 = smul.addr %s557, 8
          %s559 = scalar_lea.vmem %s5, %s558
        $region158: #{wrapper_forward.1} parent=31 // pred_fallthru
          _
        // Predicated region
        $region159: #{wrapper_forward.1} parent=31 // pred_check
          %p560 = pneg %p218
        $region160: #{wrapper_forward.1} parent=31 // pred_check_branch
          %562 = sbr.rel (%p560) target = $region162
        $region161: #{wrapper_forward.1} parent=31 // pred_region
          %p563 = scmp.lt.s32.totalorder %s27, 1
          %s564 = scalar_select %p563, %s27, 1
          %s565 = smul.addr %s564, 8
          %s566 = smul.addr %s565, 8
          %s567 = scalar_lea.vmem %s6, %s566
        $region162: #{wrapper_forward.1} parent=31 // pred_fallthru
          _
      $region32: #{wrapper_forward.1} parent=5 // pred_fallthru
        _
      %p568 = scmp.le.s32.totalorder 1, %s20
      %p569 = scmp.lt.s32.totalorder %s20, 5
      %p570 = pnand %p568, %p569
      %p571 = pneg %p570
      // Predicated region
      $region163: #{wrapper_forward.1} parent=5 // pred_check
        _
      $region164: #{wrapper_forward.1} parent=5 // pred_check_branch
        %573 = sbr.rel (%p570) target = $region166
      $region165: #{wrapper_forward.1} parent=5 // pred_region
        %s574 = ssub.s32 %s20, 1
        %s575 = sand.u32 %s47, 1
        %s576 = sand.u32 %s47, 1
        %s577 = smul.addr %s576, 32
        %s578 = scalar_lea.vmem [#allocation2], %s577
        // Predicated region
        $region167: #{wrapper_forward.1} parent=165 // pred_check
          %p579 = pneg %p60
        $region168: #{wrapper_forward.1} parent=165 // pred_check_branch
          %581 = sbr.rel (%p579) target = $region170
        $region169: #{wrapper_forward.1} parent=165 // pred_region
          _
        $region170: #{wrapper_forward.1} parent=165 // pred_fallthru
          _
        %s582 = sand.u32 %s75, 1
        %s583 = sand.u32 %s75, 1
        %s584 = smul.addr %s583, 32
        %s585 = scalar_lea.vmem [#allocation3], %s584
        // Predicated region
        $region171: #{wrapper_forward.1} parent=165 // pred_check
          %p586 = pneg %p88
        $region172: #{wrapper_forward.1} parent=165 // pred_check_branch
          %588 = sbr.rel (%p586) target = $region174
        $region173: #{wrapper_forward.1} parent=165 // pred_region
          _
        $region174: #{wrapper_forward.1} parent=165 // pred_fallthru
          _
        %s589 = sand.u32 %s103, 1
        %s590 = sand.u32 %s103, 1
        %s591 = smul.addr %s590, 32
        %s592 = scalar_lea.vmem [#allocation4], %s591
        // Predicated region
        $region175: #{wrapper_forward.1} parent=165 // pred_check
          %p593 = pneg %p116
        $region176: #{wrapper_forward.1} parent=165 // pred_check_branch
          %595 = sbr.rel (%p593) target = $region178
        $region177: #{wrapper_forward.1} parent=165 // pred_region
          _
        $region178: #{wrapper_forward.1} parent=165 // pred_fallthru
          _
        %s596 = sand.u32 %s47, 1
        %s597 = sand.u32 %s47, 1
        %s598 = smul.addr %s597, 32
        %s599 = scalar_lea.vmem [#allocation2], %s598
        %p600 = pneg %p60
        %p601 = pneg %p57
        %s602 = sand.u32 %s75, 1
        %s603 = sand.u32 %s75, 1
        %s604 = smul.addr %s603, 32
        %s605 = scalar_lea.vmem [#allocation3], %s604
        %p606 = pneg %p88
        %p607 = pneg %p85
        %s608 = sand.u32 %s103, 1
        %s609 = sand.u32 %s103, 1
        %s610 = smul.addr %s609, 32
        %s611 = scalar_lea.vmem [#allocation4], %s610
        %p612 = pneg %p116
        %p613 = pneg %p113
        %p614 = scmp.lt.s32.totalorder %s29, 1
        %s615 = scalar_select %p614, %s29, 1
        %p616 = scmp.lt.s32.totalorder %s30, 1
        %s617 = scalar_select %p616, %s30, 1
        %s618 = smul.addr %s615, 2
        %s619 = sadd.s32 %s617, %s618
        %s620 = scalar_lea.vmem %s3, %s619
        %p621 = pneg %p144
        %p622 = pneg %p141
        %p623 = scmp.lt.s32.totalorder %s29, 1
        %s624 = scalar_select %p623, %s29, 1
        %p625 = scmp.lt.s32.totalorder %s30, 1
        %s626 = scalar_select %p625, %s30, 1
        %s627 = smul.addr %s624, 2
        %s628 = sadd.s32 %s626, %s627
        %s629 = scalar_lea.vmem %s4, %s628
        %p630 = pneg %p172
        %p631 = pneg %p169
        %p632 = scmp.lt.s32.totalorder %s29, 1
        %s633 = scalar_select %p632, %s29, 1
        %s634 = smul.addr %s633, 8
        %s635 = smul.addr %s634, 8
        %s636 = scalar_lea.vmem %s5, %s635
        %p637 = pneg %p198
        %p638 = pneg %p195
        %p639 = scmp.lt.s32.totalorder %s29, 1
        %s640 = scalar_select %p639, %s29, 1
        %s641 = smul.addr %s640, 8
        %s642 = smul.addr %s641, 8
        %s643 = scalar_lea.vmem %s6, %s642
        %p644 = pneg %p224
        %p645 = pneg %p221
        %p646 = pneg %p245
        %p647 = pneg %p242
        %p648 = pneg %p266
        %p649 = pneg %p263
        %p650 = pneg %p287
        %p651 = pneg %p284
        %p652 = pneg %p308
        %p653 = pneg %p305
        %p654 = pneg %p336
        %p655 = pneg %p333
        %s656 = sand.u32 %s323, 1
        %s657 = scalar_lea.sflag [#allocation6], %s656
        %s658 = sand.u32 %s323, 1
        %s659 = smul.addr %s658, 32
        %s660 = scalar_lea.vmem [#allocation5], %s659
        %p661 = scmp.lt.s32.totalorder %s29, 1
        %s662 = scalar_select %p661, %s29, 1
        %p663 = scmp.lt.s32.totalorder %s30, 1
        %s664 = scalar_select %p663, %s30, 1
        %s665 = smul.addr %s662, 2
        %s666 = sadd.s32 %s664, %s665
        %s667 = scalar_lea.vmem %s3, %s666
        %p668 = scmp.lt.s32.totalorder %s29, 1
        %s669 = scalar_select %p668, %s29, 1
        %p670 = scmp.lt.s32.totalorder %s30, 1
        %s671 = scalar_select %p670, %s30, 1
        %s672 = smul.addr %s669, 2
        %s673 = sadd.s32 %s671, %s672
        %s674 = scalar_lea.vmem %s4, %s673
        %p675 = scmp.lt.s32.totalorder %s29, 1
        %s676 = scalar_select %p675, %s29, 1
        %s677 = smul.addr %s676, 8
        %s678 = smul.addr %s677, 8
        %s679 = scalar_lea.vmem %s5, %s678
        %p680 = scmp.lt.s32.totalorder %s29, 1
        %s681 = scalar_select %p680, %s29, 1
        %s682 = smul.addr %s681, 8
        %s683 = smul.addr %s682, 8
        %s684 = scalar_lea.vmem %s6, %s683
        %v685 = vld [vmem:[%s578] sm:$0xff]
        %v686 = vld [vmem:[%s578 + $0x8] sm:$0xff]
        %v687 = vld [vmem:[%s578 + $0x10] sm:$0xff]
        %v688 = vld [vmem:[%s578 + $0x18] sm:$0xff]
        %v689 = vld [vmem:[%s592] sm:$0xff]
        %v690 = vld [vmem:[%s592 + $0x8] sm:$0xff]
        %v691 = vld [vmem:[%s592 + $0x10] sm:$0xff]
        %v692 = vld [vmem:[%s592 + $0x18] sm:$0xff]
        %v693 = vld [vmem:[%s667] sm:$0x1]
        %v695 = vlaneseq
        %v696 = vshrl.u32 %v695, 7
        %v697 = vsub.s32 0, %v696
        %v698 = vrot.slane %v693, %v697
        %v700 = vmul.f32 %v689, %v698
        %v701 = vmul.f32 %v690, %v698
        %v702 = vmul.f32 %v691, %v698
        %v703 = vmul.f32 %v692, %v698
        %v704 = vld [vmem:[%s7] sm:$0xff]
        %v705 = vld [vmem:[%s7 + $0x8] sm:$0xff]
        %v706 = vld [vmem:[%s7 + $0x10] sm:$0xff]
        %v707 = vld [vmem:[%s7 + $0x18] sm:$0xff]
        %v708 = vld [vmem:[%s7 + $0x20] sm:$0xff]
        %v709 = vld [vmem:[%s7 + $0x28] sm:$0xff]
        %v710 = vld [vmem:[%s7 + $0x30] sm:$0xff]
        %v711 = vld [vmem:[%s7 + $0x38] sm:$0xff]
        %v712 = vld [vmem:[%s679] sm:$0xff]
        %v713 = vld [vmem:[%s679 + $0x8] sm:$0xff]
        %v714 = vld [vmem:[%s679 + $0x10] sm:$0xff]
        %v715 = vld [vmem:[%s679 + $0x18] sm:$0xff]
        %v716 = vld [vmem:[%s679 + $0x20] sm:$0xff]
        %v717 = vld [vmem:[%s679 + $0x28] sm:$0xff]
        %v718 = vld [vmem:[%s679 + $0x30] sm:$0xff]
        %v719 = vld [vmem:[%s679 + $0x38] sm:$0xff]
        %721 = vset.pattern.permute.xlu0 0
        %722 = vperm.xlu0 %721, %v712
        %v723 = vpop.permute.xlu0 %722
        %726 = vset.pattern.permute.xlu0 0
        %727 = vperm.xlu0 %726, %v713
        %v728 = vpop.permute.xlu0 %727
        %731 = vset.pattern.permute.xlu0 0
        %732 = vperm.xlu0 %731, %v714
        %v733 = vpop.permute.xlu0 %732
        %736 = vset.pattern.permute.xlu0 0
        %737 = vperm.xlu0 %736, %v715
        %v738 = vpop.permute.xlu0 %737
        %741 = vset.pattern.permute.xlu0 0
        %742 = vperm.xlu0 %741, %v716
        %v743 = vpop.permute.xlu0 %742
        %746 = vset.pattern.permute.xlu0 0
        %747 = vperm.xlu0 %746, %v717
        %v748 = vpop.permute.xlu0 %747
        %751 = vset.pattern.permute.xlu0 0
        %752 = vperm.xlu0 %751, %v718
        %v753 = vpop.permute.xlu0 %752
        %756 = vset.pattern.permute.xlu0 0
        %757 = vperm.xlu0 %756, %v719
        %v758 = vpop.permute.xlu0 %757
        %vm760 = vcmask 523264
        %v762 = vsel %vm760, %v704, 0
        %v765 = vsel %vm760, %v705, 0
        %v768 = vsel %vm760, %v706, 0
        %v771 = vsel %vm760, %v707, 0
        %v774 = vsel %vm760, %v708, 0
        %v777 = vsel %vm760, %v709, 0
        %v780 = vsel %vm760, %v710, 0
        %v783 = vsel %vm760, %v711, 0
        %785 = vmatprep.subr.mxu0 0.0
        %786 = vmatpush1.msra.mxu0 %v685
        %787 = vmatprep.subr.mxu0 0.0
        %788 = vmatpush1.msra.mxu0 %v686
        %789 = vmatprep.subr.mxu0 0.0
        %790 = vmatpush1.msra.mxu0 %v687
        %791 = vmatprep.subr.mxu0 0.0
        %792 = vmatpush1.msra.mxu0 %v688
        %793 = vmatprep.subr.mxu0 0.0
        %794 = vmatpush1.msra.mxu0 %v700
        %795 = vmatprep.subr.mxu0 0.0
        %796 = vmatpush1.msra.mxu0 %v701
        %797 = vmatprep.subr.mxu0 0.0
        %798 = vmatpush1.msra.mxu0 %v702
        %799 = vmatprep.subr.mxu0 0.0
        %800 = vmatpush1.msra.mxu0 %v703
        %801 = vmatprep.subr.mxu0 0.0
        %802 = vmatpush1.msra.mxu0 0.0
        %803 = vmatprep.subr.mxu0 0.0
        %804 = vmatpush1.msra.mxu0 0.0
        %805 = vmatprep.subr.mxu0 0.0
        %806 = vmatpush1.msra.mxu0 0.0
        %807 = vmatprep.subr.mxu0 0.0
        %808 = vmatpush1.msra.mxu0 0.0
        %809 = vmatprep.subr.mxu0 0.0
        %810 = vmatpush1.msra.mxu0 0.0
        %811 = vmatprep.subr.mxu0 0.0
        %812 = vmatpush1.msra.mxu0 0.0
        %813 = vmatprep.subr.mxu0 0.0
        %814 = vmatpush1.msra.mxu0 0.0
        %815 = vmatprep.subr.mxu0 0.0
        %816 = vmatpush1.msra.mxu0 0.0
        %817 = vmatprep.subr.mxu0 0.0
        %818 = vmatpush1.msra.mxu0 0.0
        %819 = vmatprep.subr.mxu0 0.0
        %820 = vmatpush1.msra.mxu0 0.0
        %821 = vmatprep.subr.mxu0 0.0
        %822 = vmatpush1.msra.mxu0 0.0
        %823 = vmatprep.subr.mxu0 0.0
        %824 = vmatpush1.msra.mxu0 0.0
        %825 = vmatprep.subr.mxu0 0.0
        %826 = vmatpush1.msra.mxu0 0.0
        %827 = vmatprep.subr.mxu0 0.0
        %828 = vmatpush1.msra.mxu0 0.0
        %829 = vmatprep.subr.mxu0 0.0
        %830 = vmatpush1.msra.mxu0 0.0
        %831 = vmatprep.subr.mxu0 0.0
        %832 = vmatpush1.msra.mxu0 0.0
        %833 = vmatprep.subr.mxu0 0.0
        %834 = vmatpush1.msra.mxu0 0.0
        %835 = vmatprep.subr.mxu0 0.0
        %836 = vmatpush1.msra.mxu0 0.0
        %837 = vmatprep.subr.mxu0 0.0
        %838 = vmatpush1.msra.mxu0 0.0
        %839 = vmatprep.subr.mxu0 0.0
        %840 = vmatpush1.msra.mxu0 0.0
        %841 = vmatprep.subr.mxu0 0.0
        %842 = vmatpush1.msra.mxu0 0.0
        %843 = vmatprep.subr.mxu0 0.0
        %844 = vmatpush1.msra.mxu0 0.0
        %845 = vmatprep.subr.mxu0 0.0
        %846 = vmatpush1.msra.mxu0 0.0
        %847 = vmatprep.subr.mxu0 0.0
        %848 = vmatpush1.msra.mxu0 0.0
        %849 = vmatprep.mubr.f32.mxu0 0.0
        %850 = vmatmul.mubr.f32.gmra.mrb[0].mxu0 %v762
        %v851 = vpop.f32.mrb[0].mxu0
        %v852 = vadd.f32 %v723, %v851
        %v853 = vpop.f32.mrb[0].mxu0
        %854 = vmatprep.mubr.f32.mxu0 0.0
        %855 = vmatmul.mubr.f32.gmra.mrb[0].mxu0 %v765
        %v856 = vpop.f32.mrb[0].mxu0
        %v857 = vadd.f32 %v728, %v856
        %v858 = vpop.f32.mrb[0].mxu0
        %859 = vmatprep.mubr.f32.mxu0 0.0
        %860 = vmatmul.mubr.f32.gmra.mrb[0].mxu0 %v768
        %v861 = vpop.f32.mrb[0].mxu0
        %v862 = vadd.f32 %v733, %v861
        %v863 = vpop.f32.mrb[0].mxu0
        %864 = vmatprep.mubr.f32.mxu0 0.0
        %865 = vmatmul.mubr.f32.gmra.mrb[0].mxu0 %v771
        %v866 = vpop.f32.mrb[0].mxu0
        %v867 = vadd.f32 %v738, %v866
        %v868 = vpop.f32.mrb[0].mxu0
        %869 = vmatprep.mubr.f32.mxu0 0.0
        %870 = vmatmul.mubr.f32.gmra.mrb[0].mxu0 %v774
        %v871 = vpop.f32.mrb[0].mxu0
        %v872 = vadd.f32 %v743, %v871
        %v873 = vpop.f32.mrb[0].mxu0
        %874 = vmatprep.mubr.f32.mxu0 0.0
        %875 = vmatmul.mubr.f32.gmra.mrb[0].mxu0 %v777
        %v876 = vpop.f32.mrb[0].mxu0
        %v877 = vadd.f32 %v748, %v876
        %v878 = vpop.f32.mrb[0].mxu0
        %879 = vmatprep.mubr.f32.mxu0 0.0
        %880 = vmatmul.mubr.f32.gmra.mrb[0].mxu0 %v780
        %v881 = vpop.f32.mrb[0].mxu0
        %v882 = vadd.f32 %v753, %v881
        %v883 = vpop.f32.mrb[0].mxu0
        %884 = vmatprep.mubr.f32.mxu0 0.0
        %885 = vmatmul.mubr.f32.gmra.mrb[0].mxu0 %v783
        %v886 = vpop.f32.mrb[0].mxu0
        %v887 = vadd.f32 %v758, %v886
        %v888 = vpop.f32.mrb[0].mxu0
        %889 = vdwg.mxu0
        %v890 = vld [vmem:[%s8] sm:$0xff]
        %v891 = vld [vmem:[%s8 + $0x8] sm:$0xff]
        %v892 = vld [vmem:[%s8 + $0x10] sm:$0xff]
        %v893 = vld [vmem:[%s8 + $0x18] sm:$0xff]
        %v894 = vld [vmem:[%s8 + $0x20] sm:$0xff]
        %v895 = vld [vmem:[%s8 + $0x28] sm:$0xff]
        %v896 = vld [vmem:[%s8 + $0x30] sm:$0xff]
        %v897 = vld [vmem:[%s8 + $0x38] sm:$0xff]
        %v898 = vld [vmem:[%s585] sm:$0xff]
        %v899 = vld [vmem:[%s585 + $0x8] sm:$0xff]
        %v900 = vld [vmem:[%s585 + $0x10] sm:$0xff]
        %v901 = vld [vmem:[%s585 + $0x18] sm:$0xff]
        %vm902 = vcmask 261120
        %v904 = vsel %vm902, %v890, 0
        %v907 = vsel %vm902, %v891, 0
        %v910 = vsel %vm902, %v892, 0
        %v913 = vsel %vm902, %v893, 0
        %v916 = vsel %vm902, %v894, 0
        %v919 = vsel %vm902, %v895, 0
        %v922 = vsel %vm902, %v896, 0
        %v925 = vsel %vm902, %v897, 0
        %927 = vmatprep.subr.mxu0 0.0
        %928 = vmatpush1.msra.mxu0 %v898
        %929 = vmatprep.subr.mxu0 0.0
        %930 = vmatpush1.msra.mxu0 %v899
        %931 = vmatprep.subr.mxu0 0.0
        %932 = vmatpush1.msra.mxu0 %v900
        %933 = vmatprep.subr.mxu0 0.0
        %934 = vmatpush1.msra.mxu0 %v901
        %935 = vmatprep.subr.mxu0 0.0
        %936 = vmatpush1.msra.mxu0 0.0
        %937 = vmatprep.subr.mxu0 0.0
        %938 = vmatpush1.msra.mxu0 0.0
        %939 = vmatprep.subr.mxu0 0.0
        %940 = vmatpush1.msra.mxu0 0.0
        %941 = vmatprep.subr.mxu0 0.0
        %942 = vmatpush1.msra.mxu0 0.0
        %943 = vmatprep.subr.mxu0 0.0
        %944 = vmatpush1.msra.mxu0 0.0
        %945 = vmatprep.subr.mxu0 0.0
        %946 = vmatpush1.msra.mxu0 0.0
        %947 = vmatprep.subr.mxu0 0.0
        %948 = vmatpush1.msra.mxu0 0.0
        %949 = vmatprep.subr.mxu0 0.0
        %950 = vmatpush1.msra.mxu0 0.0
        %951 = vmatprep.subr.mxu0 0.0
        %952 = vmatpush1.msra.mxu0 0.0
        %953 = vmatprep.subr.mxu0 0.0
        %954 = vmatpush1.msra.mxu0 0.0
        %955 = vmatprep.subr.mxu0 0.0
        %956 = vmatpush1.msra.mxu0 0.0
        %957 = vmatprep.subr.mxu0 0.0
        %958 = vmatpush1.msra.mxu0 0.0
        %959 = vmatprep.subr.mxu0 0.0
        %960 = vmatpush1.msra.mxu0 0.0
        %961 = vmatprep.subr.mxu0 0.0
        %962 = vmatpush1.msra.mxu0 0.0
        %963 = vmatprep.subr.mxu0 0.0
        %964 = vmatpush1.msra.mxu0 0.0
        %965 = vmatprep.subr.mxu0 0.0
        %966 = vmatpush1.msra.mxu0 0.0
        %967 = vmatprep.subr.mxu0 0.0
        %968 = vmatpush1.msra.mxu0 0.0
        %969 = vmatprep.subr.mxu0 0.0
        %970 = vmatpush1.msra.mxu0 0.0
        %971 = vmatprep.subr.mxu0 0.0
        %972 = vmatpush1.msra.mxu0 0.0
        %973 = vmatprep.subr.mxu0 0.0
        %974 = vmatpush1.msra.mxu0 0.0
        %975 = vmatprep.subr.mxu0 0.0
        %976 = vmatpush1.msra.mxu0 0.0
        %977 = vmatprep.subr.mxu0 0.0
        %978 = vmatpush1.msra.mxu0 0.0
        %979 = vmatprep.subr.mxu0 0.0
        %980 = vmatpush1.msra.mxu0 0.0
        %981 = vmatprep.subr.mxu0 0.0
        %982 = vmatpush1.msra.mxu0 0.0
        %983 = vmatprep.subr.mxu0 0.0
        %984 = vmatpush1.msra.mxu0 0.0
        %985 = vmatprep.subr.mxu0 0.0
        %986 = vmatpush1.msra.mxu0 0.0
        %987 = vmatprep.subr.mxu0 0.0
        %988 = vmatpush1.msra.mxu0 0.0
        %989 = vmatprep.subr.mxu0 0.0
        %990 = vmatpush1.msra.mxu0 0.0
        %991 = vmatprep.mubr.f32.mxu0 0.0
        %992 = vmatmul.mubr.f32.gmra.mrb[0].mxu0 %v904
        %v993 = vpop.f32.mrb[0].mxu0
        %v994 = vadd.f32 0.0, %v993
        %v995 = vpop.f32.mrb[0].mxu0
        %996 = vmatprep.mubr.f32.mxu0 0.0
        %997 = vmatmul.mubr.f32.gmra.mrb[0].mxu0 %v907
        %v998 = vpop.f32.mrb[0].mxu0
        %v999 = vadd.f32 0.0, %v998
        %v1000 = vpop.f32.mrb[0].mxu0
        %1001 = vmatprep.mubr.f32.mxu0 0.0
        %1002 = vmatmul.mubr.f32.gmra.mrb[0].mxu0 %v910
        %v1003 = vpop.f32.mrb[0].mxu0
        %v1004 = vadd.f32 0.0, %v1003
        %v1005 = vpop.f32.mrb[0].mxu0
        %1006 = vmatprep.mubr.f32.mxu0 0.0
        %1007 = vmatmul.mubr.f32.gmra.mrb[0].mxu0 %v913
        %v1008 = vpop.f32.mrb[0].mxu0
        %v1009 = vadd.f32 0.0, %v1008
        %v1010 = vpop.f32.mrb[0].mxu0
        %1011 = vmatprep.mubr.f32.mxu0 0.0
        %1012 = vmatmul.mubr.f32.gmra.mrb[0].mxu0 %v916
        %v1013 = vpop.f32.mrb[0].mxu0
        %v1014 = vadd.f32 0.0, %v1013
        %v1015 = vpop.f32.mrb[0].mxu0
        %1016 = vmatprep.mubr.f32.mxu0 0.0
        %1017 = vmatmul.mubr.f32.gmra.mrb[0].mxu0 %v919
        %v1018 = vpop.f32.mrb[0].mxu0
        %v1019 = vadd.f32 0.0, %v1018
        %v1020 = vpop.f32.mrb[0].mxu0
        %1021 = vmatprep.mubr.f32.mxu0 0.0
        %1022 = vmatmul.mubr.f32.gmra.mrb[0].mxu0 %v922
        %v1023 = vpop.f32.mrb[0].mxu0
        %v1024 = vadd.f32 0.0, %v1023
        %v1025 = vpop.f32.mrb[0].mxu0
        %1026 = vmatprep.mubr.f32.mxu0 0.0
        %1027 = vmatmul.mubr.f32.gmra.mrb[0].mxu0 %v925
        %v1028 = vpop.f32.mrb[0].mxu0
        %v1029 = vadd.f32 0.0, %v1028
        %v1030 = vpop.f32.mrb[0].mxu0
        %1031 = vdwg.mxu0
        %v1032 = vadd.f32 %v852, %v994
        %v1033 = vadd.f32 %v857, %v999
        %v1034 = vadd.f32 %v862, %v1004
        %v1035 = vadd.f32 %v867, %v1009
        %v1036 = vadd.f32 %v872, %v1014
        %v1037 = vadd.f32 %v877, %v1019
        %v1038 = vadd.f32 %v882, %v1024
        %v1039 = vadd.f32 %v887, %v1029
        %v1040 = vmul.f32 %v1032, 0.5
        %v1041 = vmul.f32 %v1033, 0.5
        %v1042 = vmul.f32 %v1034, 0.5
        %v1043 = vmul.f32 %v1035, 0.5
        %v1044 = vmul.f32 %v1036, 0.5
        %v1045 = vmul.f32 %v1037, 0.5
        %v1046 = vmul.f32 %v1038, 0.5
        %v1047 = vmul.f32 %v1039, 0.5
        %v1048 = vmul.f32 %v1032, 0.044715
        %v1049 = vmul.f32 %v1033, 0.044715
        %v1050 = vmul.f32 %v1034, 0.044715
        %v1051 = vmul.f32 %v1035, 0.044715
        %v1052 = vmul.f32 %v1036, 0.044715
        %v1053 = vmul.f32 %v1037, 0.044715
        %v1054 = vmul.f32 %v1038, 0.044715
        %v1055 = vmul.f32 %v1039, 0.044715
        %v1056 = vmul.f32 %v1048, %v1032
        %v1057 = vmul.f32 %v1049, %v1033
        %v1058 = vmul.f32 %v1050, %v1034
        %v1059 = vmul.f32 %v1051, %v1035
        %v1060 = vmul.f32 %v1052, %v1036
        %v1061 = vmul.f32 %v1053, %v1037
        %v1062 = vmul.f32 %v1054, %v1038
        %v1063 = vmul.f32 %v1055, %v1039
        %v1064 = vmul.f32 %v1056, %v1032
        %v1065 = vmul.f32 %v1057, %v1033
        %v1066 = vmul.f32 %v1058, %v1034
        %v1067 = vmul.f32 %v1059, %v1035
        %v1068 = vmul.f32 %v1060, %v1036
        %v1069 = vmul.f32 %v1061, %v1037
        %v1070 = vmul.f32 %v1062, %v1038
        %v1071 = vmul.f32 %v1063, %v1039
        %v1072 = vadd.f32 %v1032, %v1064
        %v1073 = vadd.f32 %v1033, %v1065
        %v1074 = vadd.f32 %v1034, %v1066
        %v1075 = vadd.f32 %v1035, %v1067
        %v1076 = vadd.f32 %v1036, %v1068
        %v1077 = vadd.f32 %v1037, %v1069
        %v1078 = vadd.f32 %v1038, %v1070
        %v1079 = vadd.f32 %v1039, %v1071
        %v1080 = vmul.f32 %v1072, 0.7978846
        %v1081 = vmul.f32 %v1073, 0.7978846
        %v1082 = vmul.f32 %v1074, 0.7978846
        %v1083 = vmul.f32 %v1075, 0.7978846
        %v1084 = vmul.f32 %v1076, 0.7978846
        %v1085 = vmul.f32 %v1077, 0.7978846
        %v1086 = vmul.f32 %v1078, 0.7978846
        %v1087 = vmul.f32 %v1079, 0.7978846
        %v1088 = vtanh.pop %v1080
        %v1089 = vtanh.pop %v1081
        %v1090 = vtanh.pop %v1082
        %v1091 = vtanh.pop %v1083
        %v1092 = vtanh.pop %v1084
        %v1093 = vtanh.pop %v1085
        %v1094 = vtanh.pop %v1086
        %v1095 = vtanh.pop %v1087
        %v1096 = vadd.f32 %v1088, 1.0
        %v1097 = vadd.f32 %v1089, 1.0
        %v1098 = vadd.f32 %v1090, 1.0
        %v1099 = vadd.f32 %v1091, 1.0
        %v1100 = vadd.f32 %v1092, 1.0
        %v1101 = vadd.f32 %v1093, 1.0
        %v1102 = vadd.f32 %v1094, 1.0
        %v1103 = vadd.f32 %v1095, 1.0
        %v1104 = vmul.f32 %v1040, %v1096
        %v1105 = vmul.f32 %v1041, %v1097
        %v1106 = vmul.f32 %v1042, %v1098
        %v1107 = vmul.f32 %v1043, %v1099
        %v1108 = vmul.f32 %v1044, %v1100
        %v1109 = vmul.f32 %v1045, %v1101
        %v1110 = vmul.f32 %v1046, %v1102
        %v1111 = vmul.f32 %v1047, %v1103
        %v1112 = vld [vmem:[%s684] sm:$0xff]
        %v1113 = vld [vmem:[%s684 + $0x8] sm:$0xff]
        %v1114 = vld [vmem:[%s684 + $0x10] sm:$0xff]
        %v1115 = vld [vmem:[%s684 + $0x18] sm:$0xff]
        %v1116 = vld [vmem:[%s684 + $0x20] sm:$0xff]
        %v1117 = vld [vmem:[%s684 + $0x28] sm:$0xff]
        %v1118 = vld [vmem:[%s684 + $0x30] sm:$0xff]
        %v1119 = vld [vmem:[%s684 + $0x38] sm:$0xff]
        %1121 = vset.pattern.permute.xlu0 0
        %1122 = vperm.xlu0 %1121, %v1112
        %v1123 = vpop.permute.xlu0 %1122
        %1126 = vset.pattern.permute.xlu0 0
        %1127 = vperm.xlu0 %1126, %v1113
        %v1128 = vpop.permute.xlu0 %1127
        %1131 = vset.pattern.permute.xlu0 0
        %1132 = vperm.xlu0 %1131, %v1114
        %v1133 = vpop.permute.xlu0 %1132
        %1136 = vset.pattern.permute.xlu0 0
        %1137 = vperm.xlu0 %1136, %v1115
        %v1138 = vpop.permute.xlu0 %1137
        %1141 = vset.pattern.permute.xlu0 0
        %1142 = vperm.xlu0 %1141, %v1116
        %v1143 = vpop.permute.xlu0 %1142
        %1146 = vset.pattern.permute.xlu0 0
        %1147 = vperm.xlu0 %1146, %v1117
        %v1148 = vpop.permute.xlu0 %1147
        %1151 = vset.pattern.permute.xlu0 0
        %1152 = vperm.xlu0 %1151, %v1118
        %v1153 = vpop.permute.xlu0 %1152
        %1156 = vset.pattern.permute.xlu0 0
        %1157 = vperm.xlu0 %1156, %v1119
        %v1158 = vpop.permute.xlu0 %1157
        %v1160 = vadd.f32 %v852, %v1123
        %v1161 = vadd.f32 %v857, %v1128
        %v1162 = vadd.f32 %v862, %v1133
        %v1163 = vadd.f32 %v867, %v1138
        %v1164 = vadd.f32 %v872, %v1143
        %v1165 = vadd.f32 %v877, %v1148
        %v1166 = vadd.f32 %v882, %v1153
        %v1167 = vadd.f32 %v887, %v1158
        %v1168 = vmul.f32 %v1160, 0.5
        %v1169 = vmul.f32 %v1161, 0.5
        %v1170 = vmul.f32 %v1162, 0.5
        %v1171 = vmul.f32 %v1163, 0.5
        %v1172 = vmul.f32 %v1164, 0.5
        %v1173 = vmul.f32 %v1165, 0.5
        %v1174 = vmul.f32 %v1166, 0.5
        %v1175 = vmul.f32 %v1167, 0.5
        %v1176 = vmul.f32 %v1160, 0.044715
        %v1177 = vmul.f32 %v1161, 0.044715
        %v1178 = vmul.f32 %v1162, 0.044715
        %v1179 = vmul.f32 %v1163, 0.044715
        %v1180 = vmul.f32 %v1164, 0.044715
        %v1181 = vmul.f32 %v1165, 0.044715
        %v1182 = vmul.f32 %v1166, 0.044715
        %v1183 = vmul.f32 %v1167, 0.044715
        %v1184 = vmul.f32 %v1176, %v1160
        %v1185 = vmul.f32 %v1177, %v1161
        %v1186 = vmul.f32 %v1178, %v1162
        %v1187 = vmul.f32 %v1179, %v1163
        %v1188 = vmul.f32 %v1180, %v1164
        %v1189 = vmul.f32 %v1181, %v1165
        %v1190 = vmul.f32 %v1182, %v1166
        %v1191 = vmul.f32 %v1183, %v1167
        %v1192 = vmul.f32 %v1184, %v1160
        %v1193 = vmul.f32 %v1185, %v1161
        %v1194 = vmul.f32 %v1186, %v1162
        %v1195 = vmul.f32 %v1187, %v1163
        %v1196 = vmul.f32 %v1188, %v1164
        %v1197 = vmul.f32 %v1189, %v1165
        %v1198 = vmul.f32 %v1190, %v1166
        %v1199 = vmul.f32 %v1191, %v1167
        %v1200 = vadd.f32 %v1160, %v1192
        %v1201 = vadd.f32 %v1161, %v1193
        %v1202 = vadd.f32 %v1162, %v1194
        %v1203 = vadd.f32 %v1163, %v1195
        %v1204 = vadd.f32 %v1164, %v1196
        %v1205 = vadd.f32 %v1165, %v1197
        %v1206 = vadd.f32 %v1166, %v1198
        %v1207 = vadd.f32 %v1167, %v1199
        %v1208 = vmul.f32 %v1200, 0.7978846
        %v1209 = vmul.f32 %v1201, 0.7978846
        %v1210 = vmul.f32 %v1202, 0.7978846
        %v1211 = vmul.f32 %v1203, 0.7978846
        %v1212 = vmul.f32 %v1204, 0.7978846
        %v1213 = vmul.f32 %v1205, 0.7978846
        %v1214 = vmul.f32 %v1206, 0.7978846
        %v1215 = vmul.f32 %v1207, 0.7978846
        %v1216 = vtanh.pop %v1208
        %v1217 = vtanh.pop %v1209
        %v1218 = vtanh.pop %v1210
        %v1219 = vtanh.pop %v1211
        %v1220 = vtanh.pop %v1212
        %v1221 = vtanh.pop %v1213
        %v1222 = vtanh.pop %v1214
        %v1223 = vtanh.pop %v1215
        %v1224 = vadd.f32 %v1216, 1.0
        %v1225 = vadd.f32 %v1217, 1.0
        %v1226 = vadd.f32 %v1218, 1.0
        %v1227 = vadd.f32 %v1219, 1.0
        %v1228 = vadd.f32 %v1220, 1.0
        %v1229 = vadd.f32 %v1221, 1.0
        %v1230 = vadd.f32 %v1222, 1.0
        %v1231 = vadd.f32 %v1223, 1.0
        %v1232 = vmul.f32 %v1168, %v1224
        %v1233 = vmul.f32 %v1169, %v1225
        %v1234 = vmul.f32 %v1170, %v1226
        %v1235 = vmul.f32 %v1171, %v1227
        %v1236 = vmul.f32 %v1172, %v1228
        %v1237 = vmul.f32 %v1173, %v1229
        %v1238 = vmul.f32 %v1174, %v1230
        %v1239 = vmul.f32 %v1175, %v1231
        %v1240 = vmul.f32 %v1104, 1.7
        %v1241 = vmul.f32 %v1105, 1.7
        %v1242 = vmul.f32 %v1106, 1.7
        %v1243 = vmul.f32 %v1107, 1.7
        %v1244 = vmul.f32 %v1108, 1.7
        %v1245 = vmul.f32 %v1109, 1.7
        %v1246 = vmul.f32 %v1110, 1.7
        %v1247 = vmul.f32 %v1111, 1.7
        %v1248 = vmul.f32 %v1232, 0.7
        %v1249 = vmul.f32 %v1233, 0.7
        %v1250 = vmul.f32 %v1234, 0.7
        %v1251 = vmul.f32 %v1235, 0.7
        %v1252 = vmul.f32 %v1236, 0.7
        %v1253 = vmul.f32 %v1237, 0.7
        %v1254 = vmul.f32 %v1238, 0.7
        %v1255 = vmul.f32 %v1239, 0.7
        %v1256 = vsub.f32 %v1240, %v1248
        %v1257 = vsub.f32 %v1241, %v1249
        %v1258 = vsub.f32 %v1242, %v1250
        %v1259 = vsub.f32 %v1243, %v1251
        %v1260 = vsub.f32 %v1244, %v1252
        %v1261 = vsub.f32 %v1245, %v1253
        %v1262 = vsub.f32 %v1246, %v1254
        %v1263 = vsub.f32 %v1247, %v1255
        %v1264 = vld [vmem:[%s9] sm:$0xff]
        %v1265 = vld [vmem:[%s9 + $0x8] sm:$0xff]
        %v1266 = vld [vmem:[%s9 + $0x10] sm:$0xff]
        %v1267 = vld [vmem:[%s9 + $0x18] sm:$0xff]
        %v1268 = vld [vmem:[%s10] sm:$0xff]
        %v1269 = vld [vmem:[%s10 + $0x8] sm:$0xff]
        %v1270 = vld [vmem:[%s10 + $0x10] sm:$0xff]
        %v1271 = vld [vmem:[%s10 + $0x18] sm:$0xff]
        %1273 = vset.pattern.permute.xlu0 0
        %1274 = vperm.xlu0 %1273, %v1268
        %v1275 = vpop.permute.xlu0 %1274
        %1278 = vset.pattern.permute.xlu0 0
        %1279 = vperm.xlu0 %1278, %v1269
        %v1280 = vpop.permute.xlu0 %1279
        %1283 = vset.pattern.permute.xlu0 0
        %1284 = vperm.xlu0 %1283, %v1270
        %v1285 = vpop.permute.xlu0 %1284
        %1288 = vset.pattern.permute.xlu0 0
        %1289 = vperm.xlu0 %1288, %v1271
        %v1290 = vpop.permute.xlu0 %1289
        %v1293 = vsel %vm760, %v1264, 0
        %v1296 = vsel %vm760, %v1265, 0
        %v1299 = vsel %vm760, %v1266, 0
        %v1302 = vsel %vm760, %v1267, 0
        %1304 = vmatprep.subr.mxu0 0.0
        %1305 = vmatpush1.msra.mxu0 %v1256
        %1306 = vmatprep.subr.mxu0 0.0
        %1307 = vmatpush1.msra.mxu0 %v1257
        %1308 = vmatprep.subr.mxu0 0.0
        %1309 = vmatpush1.msra.mxu0 %v1258
        %1310 = vmatprep.subr.mxu0 0.0
        %1311 = vmatpush1.msra.mxu0 %v1259
        %1312 = vmatprep.subr.mxu0 0.0
        %1313 = vmatpush1.msra.mxu0 %v1260
        %1314 = vmatprep.subr.mxu0 0.0
        %1315 = vmatpush1.msra.mxu0 %v1261
        %1316 = vmatprep.subr.mxu0 0.0
        %1317 = vmatpush1.msra.mxu0 %v1262
        %1318 = vmatprep.subr.mxu0 0.0
        %1319 = vmatpush1.msra.mxu0 %v1263
        %1320 = vmatprep.subr.mxu0 0.0
        %1321 = vmatpush1.msra.mxu0 0.0
        %1322 = vmatprep.subr.mxu0 0.0
        %1323 = vmatpush1.msra.mxu0 0.0
        %1324 = vmatprep.subr.mxu0 0.0
        %1325 = vmatpush1.msra.mxu0 0.0
        %1326 = vmatprep.subr.mxu0 0.0
        %1327 = vmatpush1.msra.mxu0 0.0
        %1328 = vmatprep.subr.mxu0 0.0
        %1329 = vmatpush1.msra.mxu0 0.0
        %1330 = vmatprep.subr.mxu0 0.0
        %1331 = vmatpush1.msra.mxu0 0.0
        %1332 = vmatprep.subr.mxu0 0.0
        %1333 = vmatpush1.msra.mxu0 0.0
        %1334 = vmatprep.subr.mxu0 0.0
        %1335 = vmatpush1.msra.mxu0 0.0
        %1336 = vmatprep.subr.mxu0 0.0
        %1337 = vmatpush1.msra.mxu0 0.0
        %1338 = vmatprep.subr.mxu0 0.0
        %1339 = vmatpush1.msra.mxu0 0.0
        %1340 = vmatprep.subr.mxu0 0.0
        %1341 = vmatpush1.msra.mxu0 0.0
        %1342 = vmatprep.subr.mxu0 0.0
        %1343 = vmatpush1.msra.mxu0 0.0
        %1344 = vmatprep.subr.mxu0 0.0
        %1345 = vmatpush1.msra.mxu0 0.0
        %1346 = vmatprep.subr.mxu0 0.0
        %1347 = vmatpush1.msra.mxu0 0.0
        %1348 = vmatprep.subr.mxu0 0.0
        %1349 = vmatpush1.msra.mxu0 0.0
        %1350 = vmatprep.subr.mxu0 0.0
        %1351 = vmatpush1.msra.mxu0 0.0
        %1352 = vmatprep.subr.mxu0 0.0
        %1353 = vmatpush1.msra.mxu0 0.0
        %1354 = vmatprep.subr.mxu0 0.0
        %1355 = vmatpush1.msra.mxu0 0.0
        %1356 = vmatprep.subr.mxu0 0.0
        %1357 = vmatpush1.msra.mxu0 0.0
        %1358 = vmatprep.subr.mxu0 0.0
        %1359 = vmatpush1.msra.mxu0 0.0
        %1360 = vmatprep.subr.mxu0 0.0
        %1361 = vmatpush1.msra.mxu0 0.0
        %1362 = vmatprep.subr.mxu0 0.0
        %1363 = vmatpush1.msra.mxu0 0.0
        %1364 = vmatprep.subr.mxu0 0.0
        %1365 = vmatpush1.msra.mxu0 0.0
        %1366 = vmatprep.subr.mxu0 0.0
        %1367 = vmatpush1.msra.mxu0 0.0
        %1368 = vmatprep.mubr.f32.mxu0 0.0
        %1369 = vmatmul.mubr.f32.gmra.mrb[0].mxu0 %v1293
        %v1370 = vpop.f32.mrb[0].mxu0
        %v1371 = vadd.f32 %v1275, %v1370
        %v1372 = vpop.f32.mrb[0].mxu0
        %1373 = vmatprep.mubr.f32.mxu0 0.0
        %1374 = vmatmul.mubr.f32.gmra.mrb[0].mxu0 %v1296
        %v1375 = vpop.f32.mrb[0].mxu0
        %v1376 = vadd.f32 %v1280, %v1375
        %v1377 = vpop.f32.mrb[0].mxu0
        %1378 = vmatprep.mubr.f32.mxu0 0.0
        %1379 = vmatmul.mubr.f32.gmra.mrb[0].mxu0 %v1299
        %v1380 = vpop.f32.mrb[0].mxu0
        %v1381 = vadd.f32 %v1285, %v1380
        %v1382 = vpop.f32.mrb[0].mxu0
        %1383 = vmatprep.mubr.f32.mxu0 0.0
        %1384 = vmatmul.mubr.f32.gmra.mrb[0].mxu0 %v1302
        %v1385 = vpop.f32.mrb[0].mxu0
        %v1386 = vadd.f32 %v1290, %v1385
        %v1387 = vpop.f32.mrb[0].mxu0
        %1388 = vdwg.mxu0
        %v1389 = vld [vmem:[%s674] sm:$0x1]
        %v1391 = vlaneseq
        %v1392 = vshrl.u32 %v1391, 7
        %v1393 = vsub.s32 0, %v1392
        %v1394 = vrot.slane %v1389, %v1393
        %v1396 = vmul.f32 %v1371, %v1394
        %v1397 = vmul.f32 %v1376, %v1394
        %v1398 = vmul.f32 %v1381, %v1394
        %v1399 = vmul.f32 %v1386, %v1394
        %1400 = vst [vmem:[%s660] sm:$0xff] %v1396
        %1401 = vst [vmem:[%s660 + $0x8] sm:$0xff] %v1397
        %1402 = vst [vmem:[%s660 + $0x10] sm:$0xff] %v1398
        %1403 = vst [vmem:[%s660 + $0x18] sm:$0xff] %v1399
        %s1404 = sand.u32 %s323, 1
        %s1405 = scalar_lea.sflag [#allocation6], %s1404
        %s1406 = sand.u32 %s323, 1
        %s1407 = smul.addr %s1406, 32
        %s1408 = scalar_lea.vmem [#allocation5], %s1407
        // Predicated region
        $region179: #{wrapper_forward.1} parent=165 // pred_check
          %p1409 = pneg %p333
        $region180: #{wrapper_forward.1} parent=165 // pred_check_branch
          %1411 = sbr.rel (%p1409) target = $region182
        $region181: #{wrapper_forward.1} parent=165 // pred_region
          %s1413 = ssub.s32 512, 512
          %1414 = vsyncadd %s1405, %s1413
          %s1415 = smul.addr %s29, 8
          %s1416 = sadd.s32 %s30, %s1415
          %s1417 = smul.addr %s1416, 128
          %s1418 = scalar_lea.hbm %s11, %s1417
          %s1419 = sshll.u32 %s1408, 4
          %s1420 = int_to_ptr.vmem [resolvable:$true] %s1419
          %1425 = dma.vmem_to_hbm [thread:$0]  %s1420, 512, %s1418, %s1405, 128, 256, 8
        $region182: #{wrapper_forward.1} parent=165 // pred_fallthru
          _
      $region166: #{wrapper_forward.1} parent=5 // pred_fallthru
        _
      %p1426 = scmp.le.s32.totalorder 2, %s20
      // Predicated region
      $region183: #{wrapper_forward.1} parent=5 // pred_check
        %p1427 = pneg %p1426
      $region184: #{wrapper_forward.1} parent=5 // pred_check_branch
        %1429 = sbr.rel (%p1427) target = $region186
      $region185: #{wrapper_forward.1} parent=5 // pred_region
        %s1430 = ssub.s32 %s20, 2
        // Predicated region
        $region187: #{wrapper_forward.1} parent=185 // pred_check
          %p1431 = pneg %p339
        $region188: #{wrapper_forward.1} parent=185 // pred_check_branch
          %1433 = sbr.rel (%p1431) target = $region190
        $region189: #{wrapper_forward.1} parent=185 // pred_region
          %s1434 = sand.u32 %s324, 1
          %s1435 = scalar_lea.sflag [#allocation6], %s1434
          %s1436 = sand.u32 %s324, 1
          %s1437 = smul.addr %s1436, 32
          %s1438 = scalar_lea.vmem [#allocation5], %s1437
          %1439 = dma.done %s1435, 512
        $region190: #{wrapper_forward.1} parent=185 // pred_fallthru
          _
      $region186: #{wrapper_forward.1} parent=5 // pred_fallthru
        _
    $region6: #{wrapper_forward.1} parent=1 // loop_footer
      %s24 = sadd.s32 1, %s20
    $region7: #{wrapper_forward.1} parent=1 // loop_footer_branch
      %19 = sbr.rel target = $region3
    $region8: #{wrapper_forward.1} parent=1 // loop_exit
      _
    %1440 = vsyncpa [#allocation6], 1
    %s1441 = scalar_lea.sflag [#allocation6], 1
    %1442 = vsyncpa %s1441, 1

</llo_original>
